<compile_context>
chip_gen: v5e
topology: v5e:2x2
jax: 0.10.0
libtpu: 0.0.40
codegen_flags: <defaults>
</compile_context>

<pallas_src>
import functools
import math

import jax
import jax.numpy as jnp
from jax.experimental import pallas as pl
from jax.experimental.pallas import tpu as pltpu

D_IN = 784            # 28*28 flattened input features (streamed unpadded)
H_HID = 256           # num_hiddens of AttentionScoring_1
SCALE = 1.0 / math.sqrt(float(H_HID))


def _scoring_attention_kernel(x_ref, w_ref, b_ref, spk_ref, mem_out_ref, mem_ref):
    """Grid = (batch_tiles, T); one recurrent attention-update step per call.

    x_ref       : (1, B_blk, D_IN)  bf16  input x_t for this batch tile
    w_ref       : (D_IN, 2H)        bf16  fused [Wq | Wk] (VMEM-resident, const index)
    b_ref       : (1, 2H)           f32   fused [bq | bk]
    spk_ref     : (1, B_blk, D_IN)  bf16  spike_t (== new membrane)
    mem_out_ref : (B_blk, D_IN)     f32   final membrane (written on last t only)
    mem_ref     : (B_blk, D_IN)     f32   VMEM scratch carrying the membrane across t
    """
    t = pl.program_id(1)
    x_bf = x_ref[0, :, :]                                    # (B_blk, D_IN) bf16

    @pl.when(t == 0)
    def _init():
        # First step: self.mem is the scalar 0.0 -> mem = inputs, spike = inputs.
        mem_ref[...] = x_bf.astype(jnp.float32)
        spk_ref[0, :, :] = x_bf

    @pl.when(t > 0)
    def _update():
        mem = mem_ref[...]                                   # (B_blk, D_IN) f32
        w_all = w_ref[...]                                   # (D_IN, 2H)   bf16

        # Fused projections on the MXU (bf16 operands, f32 accumulation):
        #   mem @ [Wq | Wk] -> [q | k_mem]   ;   x @ Wk -> k_inp
        qk = jnp.dot(mem.astype(jnp.bfloat16), w_all,
                     preferred_element_type=jnp.float32) + b_ref[...]           # (B, 2H)
        k_inp = jnp.dot(x_bf, w_all[:, H_HID:],
                        preferred_element_type=jnp.float32) + b_ref[:, H_HID:]  # (B, H)

        q = qk[:, :H_HID]
        k_mem = qk[:, H_HID:]

        # DotProductAttention: scores = <q, k>/sqrt(H), softmax over the 2 keys.
        s_mem = jnp.sum(q * k_mem, axis=-1, keepdims=True) * SCALE              # (B, 1)
        s_inp = jnp.sum(q * k_inp, axis=-1, keepdims=True) * SCALE              # (B, 1)
        m = jnp.maximum(s_mem, s_inp)
        e_mem = jnp.exp(s_mem - m)                                               # EUP
        e_inp = jnp.exp(s_inp - m)

        # (w_m*mem + w_i*x)/(w_m + w_i) == (e_m*mem + e_i*x) * 1/(e_m + e_i)
        inv = pl.reciprocal(e_mem + e_inp, approx=True)                          # EUP
        new_mem = (e_mem * mem + e_inp * x_bf.astype(jnp.float32)) * inv

        mem_ref[...] = new_mem
        spk_ref[0, :, :] = new_mem.astype(jnp.bfloat16)

    @pl.when(t == pl.num_programs(1) - 1)
    def _final():
        # f32 membrane output: constant block index over t -> one write-back per
        # batch tile (negligible extra HBM traffic).
        mem_out_ref[...] = mem_ref[...]


def _pad_to(n, m):
    return ((n + m - 1) // m) * m


def _choose_batch_tile(batch):
    """Batch tile: multiple of 16 (bf16 sublane packing), capped around 512 rows,
    with >= 2 tiles for large batches so ("parallel", ...) can shard the batch
    axis across the two v7x TensorCores."""
    b16 = _pad_to(max(batch, 16), 16)
    if b16 <= 256:
        return b16, b16
    n_tiles = max(2, (b16 + 511) // 512)
    b_block = _pad_to((b16 + n_tiles - 1) // n_tiles, 16)
    return b_block, n_tiles * b_block


@functools.partial(jax.jit, static_argnames=("b_block",))
def _scoring_sequence_padded(x_seq, w_fused, b_fused, *, b_block):
    """x_seq: (T, B_pad, D_IN) bf16 with B_pad % b_block == 0."""
    T, b_pad, _ = x_seq.shape
    n_b = b_pad // b_block

    grid_spec = pltpu.PrefetchScalarGridSpec(
        num_scalar_prefetch=0,
        grid=(n_b, T),
        in_specs=[
            # Activations stream at the native 784-wide feature dim
            # (block last dim == full array dim), bf16.
            pl.BlockSpec((1, b_block, D_IN), lambda b, t: (t, b, 0)),
            # Fused [Wq | Wk]: constant index_map -> DMA'd once, VMEM-resident.
            pl.BlockSpec((D_IN, 2 * H_HID), lambda b, t: (0, 0)),
            pl.BlockSpec((1, 2 * H_HID), lambda b, t: (0, 0)),
        ],
        out_specs=[
            pl.BlockSpec((1, b_block, D_IN), lambda b, t: (t, b, 0)),   # bf16 spikes
            pl.BlockSpec((b_block, D_IN), lambda b, t: (b, 0)),         # f32 final mem
        ],
        scratch_shapes=[pltpu.VMEM((b_block, D_IN), jnp.float32)],
    )

    flops = 2 * T * b_pad * D_IN * (3 * H_HID)
    bytes_accessed = (2 * T * b_pad * D_IN * 2            # bf16 x in + spikes out
                      + b_pad * D_IN * 4                  # f32 final membrane
                      + w_fused.size * 2 + b_fused.size * 4)

    return pl.pallas_call(
        _scoring_attention_kernel,
        out_shape=(
            jax.ShapeDtypeStruct((T, b_pad, D_IN), jnp.bfloat16),
            jax.ShapeDtypeStruct((b_pad, D_IN), jnp.float32),
        ),
        grid_spec=grid_spec,
        compiler_params=pltpu.CompilerParams(
            dimension_semantics=("parallel", "arbitrary"),
            vmem_limit_bytes=32 * 1024 * 1024,   # fits b_block=512 on v5e/v6e/v7x
        ),
        cost_estimate=pl.CostEstimate(flops=flops,
                                      transcendentals=3 * T * b_pad,
                                      bytes_accessed=bytes_accessed),
    )(x_seq, w_fused, b_fused)


def scoring_mp_forward_sequence(x_seq_nchw, params):
    """Run the full T-step ScoringMP forward (attention membrane update).

    x_seq_nchw: (T, B, 1, 28, 28) float.
    Returns (spikes (T, B, 1, 28, 28) bf16, final membrane (B, 784) f32).
    """
    T, B = x_seq_nchw.shape[:2]
    x_flat = x_seq_nchw.reshape(T, B, D_IN)

    b_block, b_pad = _choose_batch_tile(B)
    if b_pad == B:
        # No batch padding: the only wrapper pass is the unavoidable f32->bf16 cast.
        x_in = x_flat.astype(jnp.bfloat16)
    else:
        # Pad + downcast fused into one pass (padded rows are all-zero and take a
        # well-defined path: equal scores -> new_mem stays 0; no NaN/Inf risk).
        x_in = jnp.zeros((T, b_pad, D_IN), jnp.bfloat16).at[:, :B, :].set(
            x_flat.astype(jnp.bfloat16))

    # Fused bf16 weights [Wq | Wk] (MXU operands) and f32 bias [bq | bk].
    w_fused = jnp.concatenate([params["wq"], params["wk"]],
                              axis=-1).astype(jnp.bfloat16)           # (784, 512)
    b_fused = jnp.concatenate([params["bq"], params["bk"]],
                              axis=-1).astype(jnp.float32)            # (1, 512)

    spikes_p, mem_p = _scoring_sequence_padded(x_in, w_fused, b_fused,
                                               b_block=b_block)
    if b_pad == B:
        spikes = spikes_p.reshape(x_seq_nchw.shape)
    else:
        spikes = spikes_p[:, :B, :].reshape(x_seq_nchw.shape)
    final_mem = mem_p[:B, :]
    return spikes, final_mem


def init_params(key):
    """Deterministic init, PyTorch-Linear-style uniform(-1/sqrt(fan_in), ...)."""
    kq_w, kq_b, kk_w, kk_b = jax.random.split(key, 4)
    bound = 1.0 / math.sqrt(D_IN)
    wq = jax.random.uniform(kq_w, (D_IN, H_HID), jnp.float32, -bound, bound)
    bq = jax.random.uniform(kq_b, (1, H_HID), jnp.float32, -bound, bound)
    wk = jax.random.uniform(kk_w, (D_IN, H_HID), jnp.float32, -bound, bound)
    bk = jax.random.uniform(kk_b, (1, H_HID), jnp.float32, -bound, bound)
    return {"wq": wq, "bq": bq, "wk": wk, "bk": bk}


def _reference_sequence(x_seq_nchw, params):
    """Pure-JAX f32 reference mirroring the PyTorch module exactly."""
    T, B = x_seq_nchw.shape[:2]
    x = x_seq_nchw.reshape(T, B, -1).astype(jnp.float32)
    wq, bq, wk, bk = params["wq"], params["bq"], params["wk"], params["bk"]
    mem = x[0]
    outs = [mem]
    for t in range(1, T):
        xt = x[t]
        q = mem @ wq + bq
        k_m = mem @ wk + bk
        k_i = xt @ wk + bk
        s_m = jnp.sum(q * k_m, -1, keepdims=True) / math.sqrt(H_HID)
        s_i = jnp.sum(q * k_i, -1, keepdims=True) / math.sqrt(H_HID)
        w = jax.nn.softmax(jnp.concatenate([s_m, s_i], axis=-1), axis=-1)
        w_m, w_i = w[:, :1], w[:, 1:]
        mem = (w_m * mem + w_i * xt) / (w_m + w_i)
        outs.append(mem)
    return jnp.stack(outs).reshape(x_seq_nchw.shape)


if __name__ == "__main__":
    key = jax.random.PRNGKey(0)
    k_params, k_x = jax.random.split(key)
    params = init_params(k_params)

    # Small-shape run (matches the module's MNIST-style input).
    T, B = 4, 2
    x_seq = jax.random.uniform(k_x, (T, B, 1, 28, 28), jnp.float32)
    spikes, final_mem = scoring_mp_forward_sequence(x_seq, params)
    jax.block_until_ready((spikes, final_mem))

    assert spikes.shape == (T, B, 1, 28, 28) and spikes.dtype == jnp.bfloat16
    assert final_mem.shape == (B, D_IN) and final_mem.dtype == jnp.float32
    assert bool(jnp.all(jnp.isfinite(spikes.astype(jnp.float32))))
    assert bool(jnp.all(jnp.isfinite(final_mem)))

    # Tolerance accounts for bf16 MXU operands, bf16 spike stream and the
    # approx EUP reciprocal.
    ref = _reference_sequence(x_seq, params)
    err_spk = float(jnp.max(jnp.abs(spikes.astype(jnp.float32) - ref)))
    err_mem = float(jnp.max(jnp.abs(final_mem - ref[T - 1].reshape(B, D_IN))))
    assert err_spk < 5e-2, f"spike error vs f32 reference too large: {err_spk}"
    assert err_mem < 5e-2, f"final-membrane error too large: {err_mem}"

    # Longer-sequence sanity check (trajectory error growth with T, per review).
    T2, B2 = 8, 4
    x_seq2 = jax.random.uniform(jax.random.PRNGKey(1), (T2, B2, 1, 28, 28),
                                jnp.float32)
    spikes2, _ = scoring_mp_forward_sequence(x_seq2, params)
    jax.block_until_ready(spikes2)
    ref2 = _reference_sequence(x_seq2, params)
    err2 = float(jnp.max(jnp.abs(spikes2.astype(jnp.float32) - ref2)))
    assert err2 < 1e-1, f"long-sequence error too large: {err2}"

    print("KERNEL_OK")
</pallas_src>

<mosaic_0001>
module attributes {stable_mosaic.version = 11 : i64} {
  func.func @_scoring_attention_kernel(%arg0: i32, %arg1: i32, %arg2: memref<1x16x784xbf16, #tpu.memory_space<vmem>>, %arg3: memref<784x512xbf16, #tpu.memory_space<vmem>>, %arg4: memref<1x512xf32, #tpu.memory_space<vmem>>, %arg5: memref<1x16x784xbf16, #tpu.memory_space<vmem>>, %arg6: memref<16x784xf32, #tpu.memory_space<vmem>>, %arg7: memref<16x784xf32, #tpu.memory_space<vmem>>) attributes {dimension_semantics = [#tpu.dimension_semantics<parallel>, #tpu.dimension_semantics<arbitrary>], iteration_bounds = array<i64: 1, 4>, scalar_prefetch = 0 : i64, scratch_operands = 1 : i64, tpu.core_type = #tpu.core_type<tc>, window_params = [{transform_indices = @transform_0, window_bounds = array<i64: 1, 16, 784>}, {pipeline_mode = #tpu.pipeline_mode<synchronous>, transform_indices = @transform_1, window_bounds = array<i64: 784, 512>}, {pipeline_mode = #tpu.pipeline_mode<synchronous>, transform_indices = @transform_2, window_bounds = array<i64: 1, 512>}, {transform_indices = @transform_3, window_bounds = array<i64: 1, 16, 784>}, {transform_indices = @transform_4, window_bounds = array<i64: 16, 784>}]} {
    %c0 = arith.constant 0 : index
    %c0_0 = arith.constant 0 : index
    %c0_1 = arith.constant 0 : index
    %0 = vector.load %arg2[%c0, %c0_0, %c0_1] : memref<1x16x784xbf16, #tpu.memory_space<vmem>>, vector<1x16x784xbf16>
    %1 = vector.shape_cast %0 : vector<1x16x784xbf16> to vector<16x784xbf16>
    %c0_i32 = arith.constant 0 : i32
    %2 = arith.cmpi eq, %arg1, %c0_i32 : i32
    %3 = arith.extui %2 : i1 to i32
    %c0_i32_2 = arith.constant 0 : i32
    %4 = arith.cmpi ne, %3, %c0_i32_2 : i32
    scf.if %4 {
      %11 = arith.extf %1 : vector<16x784xbf16> to vector<16x784xf32>
      %c0_6 = arith.constant 0 : index
      %c0_7 = arith.constant 0 : index
      %12 = vector.load %arg7[%c0_6, %c0_7] : memref<16x784xf32, #tpu.memory_space<vmem>>, vector<16x784xf32>
      tpu.vector_store %arg7[%c0_6, %c0_7], %11 {strides = array<i32>} : memref<16x784xf32, #tpu.memory_space<vmem>>, vector<16x784xf32>,
      %c0_8 = arith.constant 0 : index
      %c0_9 = arith.constant 0 : index
      %c0_10 = arith.constant 0 : index
      %13 = vector.load %arg5[%c0_8, %c0_9, %c0_10] : memref<1x16x784xbf16, #tpu.memory_space<vmem>>, vector<1x16x784xbf16>
      %14 = vector.shape_cast %13 : vector<1x16x784xbf16> to vector<16x784xbf16>
      %15 = vector.shape_cast %1 : vector<16x784xbf16> to vector<1x16x784xbf16>
      tpu.vector_store %arg5[%c0_8, %c0_9, %c0_10], %15 {strides = array<i32>} : memref<1x16x784xbf16, #tpu.memory_space<vmem>>, vector<1x16x784xbf16>,
    } else {
    }
    %c0_i32_3 = arith.constant 0 : i32
    %5 = arith.cmpi sgt, %arg1, %c0_i32_3 : i32
    %6 = arith.extui %5 : i1 to i32
    %c0_i32_4 = arith.constant 0 : i32
    %7 = arith.cmpi ne, %6, %c0_i32_4 : i32
    scf.if %7 {
      %c0_6 = arith.constant 0 : index
      %c0_7 = arith.constant 0 : index
      %11 = vector.load %arg7[%c0_6, %c0_7] : memref<16x784xf32, #tpu.memory_space<vmem>>, vector<16x784xf32>
      %c0_8 = arith.constant 0 : index
      %c0_9 = arith.constant 0 : index
      %12 = vector.load %arg3[%c0_8, %c0_9] : memref<784x512xbf16, #tpu.memory_space<vmem>>, vector<784x512xbf16>
      %13 = arith.truncf %11 : vector<16x784xf32> to vector<16x784xbf16>
      %cst = arith.constant dense<0.000000e+00> : vector<16x512xf32>
      %14 = tpu.matmul %13, %12, %cst {dimension_numbers = #tpu.dot_dimension_numbers<[1], [0], [0], [1], [0, 0, 1, 1], [], []>} : vector<16x784xbf16>, vector<784x512xbf16>, vector<16x512xf32> -> vector<16x512xf32>
      %c0_10 = arith.constant 0 : index
      %c0_11 = arith.constant 0 : index
      %15 = vector.load %arg4[%c0_10, %c0_11] : memref<1x512xf32, #tpu.memory_space<vmem>>, vector<1x512xf32>
      %16 = vector.broadcast %15 : vector<1x512xf32> to vector<16x512xf32>
      %17 = arith.addf %14, %16 : vector<16x512xf32>
      %18 = vector.extract_strided_slice %12 {offsets = [0, 256], sizes = [784, 256], strides = [1, 1]} : vector<784x512xbf16> to vector<784x256xbf16>
      %cst_12 = arith.constant dense<0.000000e+00> : vector<16x256xf32>
      %19 = tpu.matmul %1, %18, %cst_12 {dimension_numbers = #tpu.dot_dimension_numbers<[1], [0], [0], [1], [0, 0, 1, 1], [], []>} : vector<16x784xbf16>, vector<784x256xbf16>, vector<16x256xf32> -> vector<16x256xf32>
      %c0_13 = arith.constant 0 : index
      %c256 = arith.constant 256 : index
      %20 = vector.load %arg4[%c0_13, %c256] : memref<1x512xf32, #tpu.memory_space<vmem>>, vector<1x256xf32>
      %21 = vector.broadcast %20 : vector<1x256xf32> to vector<16x256xf32>
      %22 = arith.addf %19, %21 : vector<16x256xf32>
      %23 = vector.extract_strided_slice %17 {offsets = [0, 0], sizes = [16, 256], strides = [1, 1]} : vector<16x512xf32> to vector<16x256xf32>
      %24 = vector.extract_strided_slice %17 {offsets = [0, 256], sizes = [16, 256], strides = [1, 1]} : vector<16x512xf32> to vector<16x256xf32>
      %25 = arith.mulf %23, %24 : vector<16x256xf32>
      %cst_14 = arith.constant dense<0.000000e+00> : vector<16xf32>
      %26 = vector.multi_reduction <add>, %25, %cst_14 [1] : vector<16x256xf32> to vector<16xf32>
      %27 = vector.shape_cast %26 : vector<16xf32> to vector<16x1xf32>
      %cst_15 = arith.constant 6.250000e-02 : f32
      %28 = vector.broadcast %cst_15 : f32 to vector<16x1xf32>
      %29 = arith.mulf %27, %28 : vector<16x1xf32>
      %30 = arith.mulf %23, %22 : vector<16x256xf32>
      %cst_16 = arith.constant dense<0.000000e+00> : vector<16xf32>
      %31 = vector.multi_reduction <add>, %30, %cst_16 [1] : vector<16x256xf32> to vector<16xf32>
      %32 = vector.shape_cast %31 : vector<16xf32> to vector<16x1xf32>
      %cst_17 = arith.constant 6.250000e-02 : f32
      %33 = vector.broadcast %cst_17 : f32 to vector<16x1xf32>
      %34 = arith.mulf %32, %33 : vector<16x1xf32>
      %35 = arith.maximumf %29, %34 : vector<16x1xf32>
      %36 = arith.subf %29, %35 : vector<16x1xf32>
      %37 = math.exp %36 : vector<16x1xf32>
      %38 = arith.subf %34, %35 : vector<16x1xf32>
      %39 = math.exp %38 : vector<16x1xf32>
      %40 = arith.addf %37, %39 : vector<16x1xf32>
      %41 = tpu.reciprocal %40 {approx = true} : vector<16x1xf32> -> vector<16x1xf32>
      %42 = vector.broadcast %37 : vector<16x1xf32> to vector<16x784xf32>
      %43 = arith.mulf %42, %11 : vector<16x784xf32>
      %44 = arith.extf %1 : vector<16x784xbf16> to vector<16x784xf32>
      %45 = vector.broadcast %39 : vector<16x1xf32> to vector<16x784xf32>
      %46 = arith.mulf %45, %44 : vector<16x784xf32>
      %47 = arith.addf %43, %46 : vector<16x784xf32>
      %48 = vector.broadcast %41 : vector<16x1xf32> to vector<16x784xf32>
      %49 = arith.mulf %47, %48 : vector<16x784xf32>
      %c0_18 = arith.constant 0 : index
      %c0_19 = arith.constant 0 : index
      %50 = vector.load %arg7[%c0_18, %c0_19] : memref<16x784xf32, #tpu.memory_space<vmem>>, vector<16x784xf32>
      tpu.vector_store %arg7[%c0_18, %c0_19], %49 {strides = array<i32>} : memref<16x784xf32, #tpu.memory_space<vmem>>, vector<16x784xf32>,
      %51 = arith.truncf %49 : vector<16x784xf32> to vector<16x784xbf16>
      %c0_20 = arith.constant 0 : index
      %c0_21 = arith.constant 0 : index
      %c0_22 = arith.constant 0 : index
      %52 = vector.load %arg5[%c0_20, %c0_21, %c0_22] : memref<1x16x784xbf16, #tpu.memory_space<vmem>>, vector<1x16x784xbf16>
      %53 = vector.shape_cast %52 : vector<1x16x784xbf16> to vector<16x784xbf16>
      %54 = vector.shape_cast %51 : vector<16x784xbf16> to vector<1x16x784xbf16>
      tpu.vector_store %arg5[%c0_20, %c0_21, %c0_22], %54 {strides = array<i32>} : memref<1x16x784xbf16, #tpu.memory_space<vmem>>, vector<1x16x784xbf16>,
    } else {
    }
    %c3_i32 = arith.constant 3 : i32
    %8 = arith.cmpi eq, %arg1, %c3_i32 : i32
    %9 = arith.extui %8 : i1 to i32
    %c0_i32_5 = arith.constant 0 : i32
    %10 = arith.cmpi ne, %9, %c0_i32_5 : i32
    scf.if %10 {
      %c0_6 = arith.constant 0 : index
      %c0_7 = arith.constant 0 : index
      %11 = vector.load %arg7[%c0_6, %c0_7] : memref<16x784xf32, #tpu.memory_space<vmem>>, vector<16x784xf32>
      %c0_8 = arith.constant 0 : index
      %c0_9 = arith.constant 0 : index
      %12 = vector.load %arg6[%c0_8, %c0_9] : memref<16x784xf32, #tpu.memory_space<vmem>>, vector<16x784xf32>
      tpu.vector_store %arg6[%c0_8, %c0_9], %11 {strides = array<i32>} : memref<16x784xf32, #tpu.memory_space<vmem>>, vector<16x784xf32>,
    } else {
    }
    return
  }
  func.func @transform_0(%arg0: i32, %arg1: i32) -> (i32, i32, i32) {
    %c0_i32 = arith.constant 0 : i32
    %c0_i32_0 = arith.constant 0 : i32
    return %arg1, %arg0, %c0_i32 : i32, i32, i32
  }
  func.func @transform_1(%arg0: i32, %arg1: i32) -> (i32, i32) {
    %c0_i32 = arith.constant 0 : i32
    %c0_i32_0 = arith.constant 0 : i32
    %c0_i32_1 = arith.constant 0 : i32
    return %c0_i32, %c0_i32_0 : i32, i32
  }
  func.func @transform_2(%arg0: i32, %arg1: i32) -> (i32, i32) {
    %c0_i32 = arith.constant 0 : i32
    %c0_i32_0 = arith.constant 0 : i32
    %c0_i32_1 = arith.constant 0 : i32
    return %c0_i32, %c0_i32_0 : i32, i32
  }
  func.func @transform_3(%arg0: i32, %arg1: i32) -> (i32, i32, i32) {
    %c0_i32 = arith.constant 0 : i32
    %c0_i32_0 = arith.constant 0 : i32
    return %arg1, %arg0, %c0_i32 : i32, i32, i32
  }
  func.func @transform_4(%arg0: i32, %arg1: i32) -> (i32, i32) {
    %c0_i32 = arith.constant 0 : i32
    %c0_i32_0 = arith.constant 0 : i32
    return %arg0, %c0_i32 : i32, i32
  }
}

</mosaic_0001>

<llo_original>
// kernel: _scoring_sequence_padded.1
$region0: #{_scoring_sequence_padded.1}
  #allocation0 [shape = 'u32[]', space=smem, size = 0x4, offset = 0x4, fixed_abs, tag = 'smem constant byte address 0x4 - core index']
  #allocation1 [shape = 'u32[72,128]{1,0:T(1,128)}', space=vmem, size = 0x9000, scoped, tag = 'internal scratch']
  #allocation2 [shape = 'f32[16,784]{1,0:T(8,128)}', space=vmem, size = 0xe000, scoped, tag = 'scratch operand']
  %s0 = inlined_call_operand.hbm [shape: bf16[4,16,784], index: 0, kind: input, shape index: {}]
  %s1 = inlined_call_operand.hbm [shape: bf16[784,512], index: 1, kind: input, shape index: {}]
  %s2 = inlined_call_operand.hbm [shape: f32[1,512], index: 2, kind: input, shape index: {}]
  %s3 = inlined_call_operand.hbm [shape: bf16[4,16,784], index: 3, kind: output, shape index: {0}]
  %s4 = inlined_call_operand.hbm [shape: f32[16,784], index: 4, kind: output, shape index: {1}]
  %5 = xla_tuple %s3, %s4
  %s6 = sld [smem:[#allocation0]]
  $region77: #{_scoring_sequence_padded.1} parent=0
    _
  %s8 = ssub.s32 1, %s6
  %s9 = scalar_select 0, %s8, %s6
  $region1: #{_scoring_sequence_padded.1} parent=0
    #allocation3 [shape = 'u8[57344]{0}', space=vmem, size = 0xe000, scoped, tag = 'input window, operand 0']
    #allocation4 [shape = 's32[2]{0}', space=sflag, size = 0x8, scoped, tag = 'scoped memory for _scoring_sequence_padded.1']
    #allocation5 [shape = 's32[2]{0}', space=sflag, size = 0x8, scoped, tag = 'scoped memory for _scoring_sequence_padded.1']
    #allocation6 [shape = 'u8[802816]{0}', space=vmem, size = 0xc4000, scoped, tag = 'input window, operand 1, single buffered']
    #allocation7 [shape = 's32[1]{0}', space=sflag, size = 0x4, scoped, tag = 'scoped memory for _scoring_sequence_padded.1']
    #allocation8 [shape = 'u8[2048]{0}', space=vmem, size = 0x800, scoped, tag = 'input window, operand 2, single buffered']
    #allocation9 [shape = 'u8[57344]{0}', space=vmem, size = 0xe000, scoped, tag = 'output window, operand 0']
    #allocation10 [shape = 'u8[57344]{0}', space=vmem, size = 0xe000, scoped, tag = 'output window, operand 1, single buffered']
    #allocation11 [shape = 's32[1]{0}', space=sflag, size = 0x4, scoped, tag = 'scoped memory for _scoring_sequence_padded.1']
    %10 = vsyncpa [#allocation4], 0
    %s11 = scalar_lea.sflag [#allocation4], 1
    %12 = vsyncpa %s11, 0
    %13 = vsyncpa [#allocation7], 0
    %14 = vsyncpa [#allocation5], 0
    %s15 = scalar_lea.sflag [#allocation5], 1
    %16 = vsyncpa %s15, 0
    %17 = vsyncpa [#allocation11], 0
    loop: start=0, step=1, limit=6
    $region2: #{_scoring_sequence_padded.1} parent=1 // loop_pre_header
      _
    $region3: #{_scoring_sequence_padded.1} parent=1 // loop_header
      %s19 = sphi 0, %s23
      %p20 = scmp.ge.s32.totalorder %s19, 6
      %s26 = sphi 0, %s38
      %s27 = sphi 0, %s34
      %s28 = sphi 0, %s26
      %s29 = sphi 0, %s27
      %s30 = sphi 0, %s28
      %s31 = sphi 0, %s29
      %s43 = sphi 0, %s45
      %s46 = sphi 0, %s43
      %s47 = sphi 0, %s46
      %s63 = sphi 0, %s47
      %s67 = sphi 0, %s67
      %s69 = sphi 0, %s67
      %s70 = sphi 0, %s69
      %s84 = sphi 0, %s70
      %s88 = sphi 0, %s88
      %s90 = sphi 0, %s88
      %s91 = sphi 0, %s90
      %s105 = sphi 0, %s91
      %s113 = sphi 0, %s115
      %s116 = sphi 0, %s113
      %s117 = sphi 0, %s116
      %s133 = sphi 0, %s117
      %s139 = sphi 0, %s141
      %s142 = sphi 0, %s139
      %s143 = sphi 0, %s142
      %s159 = sphi 0, %s143
    $region4: #{_scoring_sequence_padded.1} parent=1 // loop_header_branch
      %22 = sbr.rel (%p20) target = $region8
    $region5: #{_scoring_sequence_padded.1} parent=1 // loop_body
      %s24 = ssub.s32 %s19, 1
      %s25 = ssub.s32 %s19, 2
      %s32 = sadd.s32 1, %s27
      %p33 = scmp.ge.s32.totalorder %s32, 4
      %s34 = scalar_select %p33, 0, %s32
      %s35 = sadd.s32 1, %s26
      %s36 = scalar_select %p33, %s35, %s26
      %p37 = scmp.ge.s32.totalorder %s36, 1
      %s38 = scalar_select %p37, 0, %s36
      %s39 = ssub.s32 %s27, %s34
      %s40 = ssub.s32 %s26, %s38
      %s41 = sor.u32 %s39, %s40
      %p42 = scmp.eq.s32.totalorder %s41, 0
      %s44 = sadd.s32 %s43, 1
      %s45 = scalar_select %p42, %s43, %s44
      %p48 = pneg %p42
      %p49 = scmp.eq.s32.totalorder %s19, 3
      %p50 = por %p48, %p49
      %p51 = scmp.ne.s32.totalorder %s43, %s46
      %p52 = scmp.eq.s32.totalorder %s19, 0
      %p53 = por %p51, %p52
      %p54 = scmp.ne.s32.totalorder %s43, %s46
      %p55 = scmp.eq.s32.totalorder %s24, 3
      %p56 = por %p54, %p55
      %p57 = scmp.ne.s32.totalorder %s46, %s47
      %p58 = scmp.eq.s32.totalorder %s24, 0
      %p59 = por %p57, %p58
      %p60 = scmp.ne.s32.totalorder %s46, %s47
      %p61 = scmp.eq.s32.totalorder %s25, 3
      %p62 = por %p60, %p61
      %p64 = scmp.ne.s32.totalorder %s47, %s63
      %p65 = scmp.eq.s32.totalorder %s25, 0
      %p66 = por %p64, %p65
      %s68 = sadd.s32 %s67, 1
      %p71 = scmp.eq.s32.totalorder %s19, 3
      %p72 = scmp.ne.s32.totalorder %s67, %s69
      %p73 = scmp.eq.s32.totalorder %s19, 0
      %p74 = por %p72, %p73
      %p75 = scmp.ne.s32.totalorder %s67, %s69
      %p76 = scmp.eq.s32.totalorder %s24, 3
      %p77 = por %p75, %p76
      %p78 = scmp.ne.s32.totalorder %s69, %s70
      %p79 = scmp.eq.s32.totalorder %s24, 0
      %p80 = por %p78, %p79
      %p81 = scmp.ne.s32.totalorder %s69, %s70
      %p82 = scmp.eq.s32.totalorder %s25, 3
      %p83 = por %p81, %p82
      %p85 = scmp.ne.s32.totalorder %s70, %s84
      %p86 = scmp.eq.s32.totalorder %s25, 0
      %p87 = por %p85, %p86
      %s89 = sadd.s32 %s88, 1
      %p92 = scmp.eq.s32.totalorder %s19, 3
      %p93 = scmp.ne.s32.totalorder %s88, %s90
      %p94 = scmp.eq.s32.totalorder %s19, 0
      %p95 = por %p93, %p94
      %p96 = scmp.ne.s32.totalorder %s88, %s90
      %p97 = scmp.eq.s32.totalorder %s24, 3
      %p98 = por %p96, %p97
      %p99 = scmp.ne.s32.totalorder %s90, %s91
      %p100 = scmp.eq.s32.totalorder %s24, 0
      %p101 = por %p99, %p100
      %p102 = scmp.ne.s32.totalorder %s90, %s91
      %p103 = scmp.eq.s32.totalorder %s25, 3
      %p104 = por %p102, %p103
      %p106 = scmp.ne.s32.totalorder %s91, %s105
      %p107 = scmp.eq.s32.totalorder %s25, 0
      %p108 = por %p106, %p107
      %s109 = ssub.s32 %s27, %s34
      %s110 = ssub.s32 %s26, %s38
      %s111 = sor.u32 %s109, %s110
      %p112 = scmp.eq.s32.totalorder %s111, 0
      %s114 = sadd.s32 %s113, 1
      %s115 = scalar_select %p112, %s113, %s114
      %p118 = pneg %p112
      %p119 = scmp.eq.s32.totalorder %s19, 3
      %p120 = por %p118, %p119
      %p121 = scmp.ne.s32.totalorder %s113, %s116
      %p122 = scmp.eq.s32.totalorder %s19, 0
      %p123 = por %p121, %p122
      %p124 = scmp.ne.s32.totalorder %s113, %s116
      %p125 = scmp.eq.s32.totalorder %s24, 3
      %p126 = por %p124, %p125
      %p127 = scmp.ne.s32.totalorder %s116, %s117
      %p128 = scmp.eq.s32.totalorder %s24, 0
      %p129 = por %p127, %p128
      %p130 = scmp.ne.s32.totalorder %s116, %s117
      %p131 = scmp.eq.s32.totalorder %s25, 3
      %p132 = por %p130, %p131
      %p134 = scmp.ne.s32.totalorder %s117, %s133
      %p135 = scmp.eq.s32.totalorder %s25, 0
      %p136 = por %p134, %p135
      %s137 = ssub.s32 %s26, %s38
      %p138 = scmp.eq.s32.totalorder %s137, 0
      %s140 = sadd.s32 %s139, 1
      %s141 = scalar_select %p138, %s139, %s140
      %p144 = pneg %p138
      %p145 = scmp.eq.s32.totalorder %s19, 3
      %p146 = por %p144, %p145
      %p147 = scmp.ne.s32.totalorder %s139, %s142
      %p148 = scmp.eq.s32.totalorder %s19, 0
      %p149 = por %p147, %p148
      %p150 = scmp.ne.s32.totalorder %s139, %s142
      %p151 = scmp.eq.s32.totalorder %s24, 3
      %p152 = por %p150, %p151
      %p153 = scmp.ne.s32.totalorder %s142, %s143
      %p154 = scmp.eq.s32.totalorder %s24, 0
      %p155 = por %p153, %p154
      %p156 = scmp.ne.s32.totalorder %s142, %s143
      %p157 = scmp.eq.s32.totalorder %s25, 3
      %p158 = por %p156, %p157
      %p160 = scmp.ne.s32.totalorder %s143, %s159
      %p161 = scmp.eq.s32.totalorder %s25, 0
      %p162 = por %p160, %p161
      %p163 = scmp.le.s32.totalorder 1, %s19
      %p164 = scmp.lt.s32.totalorder %s19, 5
      %p165 = pnand %p163, %p164
      %p166 = pneg %p165
      // Predicated region
      $region9: #{_scoring_sequence_padded.1} parent=5 // pred_check
        _
      $region10: #{_scoring_sequence_padded.1} parent=5 // pred_check_branch
        %168 = sbr.rel (%p165) target = $region12
      $region11: #{_scoring_sequence_padded.1} parent=5 // pred_region
        %s169 = ssub.s32 %s19, 1
        // Predicated region
        $region13: #{_scoring_sequence_padded.1} parent=11 // pred_check
          %p170 = pneg %p80
        $region14: #{_scoring_sequence_padded.1} parent=11 // pred_check_branch
          %172 = sbr.rel (%p170) target = $region16
        $region15: #{_scoring_sequence_padded.1} parent=11 // pred_region
          %174 = vsyncadd [#allocation7], 0
          %s175 = sshll.u32 %s1, 4
          %s176 = int_to_ptr.hbm [resolvable:$true] %s175
          %s177 = sshll.u32 [#allocation6], 4
          %s178 = int_to_ptr.vmem [resolvable:$true] %s177
          %183 = dma.hbm_to_vmem [thread:$0]  %s176, 25088, %s178, [#allocation7], 256, 256, 16
        $region16: #{_scoring_sequence_padded.1} parent=11 // pred_fallthru
          _
        // Predicated region
        $region17: #{_scoring_sequence_padded.1} parent=11 // pred_check
          %p184 = pneg %p101
        $region18: #{_scoring_sequence_padded.1} parent=11 // pred_check_branch
          %186 = sbr.rel (%p184) target = $region20
        $region19: #{_scoring_sequence_padded.1} parent=11 // pred_region
          %188 = vsyncadd [#allocation7], 0
          %s190 = sshll.u32 %s2, 4
          %s191 = int_to_ptr.hbm [resolvable:$true] %s190
          %s192 = sshll.u32 [#allocation8], 4
          %s193 = int_to_ptr.vmem [resolvable:$true] %s192
          %195 = dma.hbm_to_vmem [thread:$0]  %s191, 64, %s193, [#allocation7]
        $region20: #{_scoring_sequence_padded.1} parent=11 // pred_fallthru
          _
      $region12: #{_scoring_sequence_padded.1} parent=5 // pred_fallthru
        _
      %p196 = scmp.lt.s32.totalorder %s19, 4
      // Predicated region
      $region21: #{_scoring_sequence_padded.1} parent=5 // pred_check
        %p197 = pneg %p196
      $region22: #{_scoring_sequence_padded.1} parent=5 // pred_check_branch
        %199 = sbr.rel (%p197) target = $region24
      $region23: #{_scoring_sequence_padded.1} parent=5 // pred_region
        // Predicated region
        $region25: #{_scoring_sequence_padded.1} parent=23 // pred_check
          %p200 = pneg %p53
        $region26: #{_scoring_sequence_padded.1} parent=23 // pred_check_branch
          %202 = sbr.rel (%p200) target = $region28
        $region27: #{_scoring_sequence_padded.1} parent=23 // pred_region
          %s203 = sand.u32 %s43, 1
          %s204 = scalar_lea.sflag [#allocation4], %s203
          %s205 = sand.u32 %s43, 1
          %s206 = smul.addr %s205, 56
          %s207 = scalar_lea.vmem [#allocation3], %s206
          %s208 = smul.u32 2, %s26
          %210 = vsyncadd %s204, 0
          %s211 = smul.addr %s208, 7
          %s212 = smul.addr %s27, 14
          %s213 = sadd.s32 %s211, %s212
          %s214 = smul.addr %s213, 4
          %s215 = scalar_lea.hbm %s0, %s214
          %s216 = sshll.u32 %s215, 4
          %s217 = int_to_ptr.hbm [resolvable:$true] %s216
          %s218 = sshll.u32 %s207, 4
          %s219 = int_to_ptr.vmem [resolvable:$true] %s218
          %224 = dma.hbm_to_vmem [thread:$0]  %s217, 896, %s219, %s204, 448, 448, 28
        $region28: #{_scoring_sequence_padded.1} parent=23 // pred_fallthru
          _
      $region24: #{_scoring_sequence_padded.1} parent=5 // pred_fallthru
        _
      %p225 = scmp.le.s32.totalorder 1, %s19
      %p226 = scmp.lt.s32.totalorder %s19, 5
      %p227 = pnand %p225, %p226
      %p228 = pneg %p227
      // Predicated region
      $region29: #{_scoring_sequence_padded.1} parent=5 // pred_check
        _
      $region30: #{_scoring_sequence_padded.1} parent=5 // pred_check_branch
        %230 = sbr.rel (%p227) target = $region32
      $region31: #{_scoring_sequence_padded.1} parent=5 // pred_region
        %s231 = ssub.s32 %s19, 1
        %s232 = sand.u32 %s46, 1
        %s233 = scalar_lea.sflag [#allocation4], %s232
        %s234 = sand.u32 %s46, 1
        %s235 = smul.addr %s234, 56
        %s236 = scalar_lea.vmem [#allocation3], %s235
        // Predicated region
        $region33: #{_scoring_sequence_padded.1} parent=31 // pred_check
          %p237 = pneg %p59
        $region34: #{_scoring_sequence_padded.1} parent=31 // pred_check_branch
          %239 = sbr.rel (%p237) target = $region36
        $region35: #{_scoring_sequence_padded.1} parent=31 // pred_region
          %241 = dma.done %s233, 896
        $region36: #{_scoring_sequence_padded.1} parent=31 // pred_fallthru
          _
        // Predicated region
        $region37: #{_scoring_sequence_padded.1} parent=31 // pred_check
          %p242 = pneg %p80
        $region38: #{_scoring_sequence_padded.1} parent=31 // pred_check_branch
          %244 = sbr.rel (%p242) target = $region40
        $region39: #{_scoring_sequence_padded.1} parent=31 // pred_region
          %246 = dma.done [#allocation7], 25088
        $region40: #{_scoring_sequence_padded.1} parent=31 // pred_fallthru
          _
        // Predicated region
        $region41: #{_scoring_sequence_padded.1} parent=31 // pred_check
          %p247 = pneg %p101
        $region42: #{_scoring_sequence_padded.1} parent=31 // pred_check_branch
          %249 = sbr.rel (%p247) target = $region44
        $region43: #{_scoring_sequence_padded.1} parent=31 // pred_region
          %251 = dma.done [#allocation7], 64
        $region44: #{_scoring_sequence_padded.1} parent=31 // pred_fallthru
          _
        %s252 = sand.u32 %s46, 1
        %s253 = scalar_lea.sflag [#allocation4], %s252
        %s254 = sand.u32 %s46, 1
        %s255 = smul.addr %s254, 56
        %s256 = scalar_lea.vmem [#allocation3], %s255
        %p257 = pneg %p59
        %p258 = pneg %p56
        %p259 = pneg %p80
        %p260 = pneg %p77
        %p261 = pneg %p101
        %p262 = pneg %p98
        %p263 = pneg %p129
        %p264 = pneg %p126
        %s265 = sand.u32 %s116, 1
        %s266 = scalar_lea.sflag [#allocation5], %s265
        %s267 = sand.u32 %s116, 1
        %s268 = smul.addr %s267, 56
        %s269 = scalar_lea.vmem [#allocation9], %s268
        %p270 = pneg %p155
        %p271 = pneg %p152
        %s272 = smul.u32 2, %s28
        %s273 = smul.u32 2, %s28
        %s274 = smul.u32 2, %s28
        %v276 = vld [vmem:[%s236] sm:$0xff]
        %v277 = vld [vmem:[%s236 + $0x8] sm:$0xff]
        %v278 = vld [vmem:[%s236 + $0x10] sm:$0xff]
        %v279 = vld [vmem:[%s236 + $0x18] sm:$0xf]
        %v280 = vld [vmem:[%s236 + $0x1c] sm:$0xff]
        %v281 = vld [vmem:[%s236 + $0x24] sm:$0xff]
        %v282 = vld [vmem:[%s236 + $0x2c] sm:$0xff]
        %v283 = vld [vmem:[%s236 + $0x34] sm:$0xf]
        %p284 = scmp.eq.s32.totalorder %s29, 0
        // Predicated region
        $region45: #{_scoring_sequence_padded.1} parent=31 // pred_check
          %p285 = pneg %p284
        $region46: #{_scoring_sequence_padded.1} parent=31 // pred_check_branch
          %287 = sbr.rel (%p285) target = $region48
        $region47: #{_scoring_sequence_padded.1} parent=31 // pred_region
          %v288 = vunpack.c.l.bf16 %v276
          %v289 = vunpack.c.h.bf16 %v276
          %v290 = vunpack.c.l.bf16 %v277
          %v291 = vunpack.c.h.bf16 %v277
          %v292 = vunpack.c.l.bf16 %v278
          %v293 = vunpack.c.h.bf16 %v278
          %v294 = vunpack.c.l.bf16 %v279
          %v295 = vunpack.c.l.bf16 %v280
          %v296 = vunpack.c.h.bf16 %v280
          %v297 = vunpack.c.l.bf16 %v281
          %v298 = vunpack.c.h.bf16 %v281
          %v299 = vunpack.c.l.bf16 %v282
          %v300 = vunpack.c.h.bf16 %v282
          %v301 = vunpack.c.l.bf16 %v283
          %302 = vst [vmem:[#allocation2] sm:$0xff] %v288
          %303 = vst [vmem:[#allocation2 + $0x8] sm:$0xff] %v289
          %304 = vst [vmem:[#allocation2 + $0x10] sm:$0xff] %v290
          %305 = vst [vmem:[#allocation2 + $0x18] sm:$0xff] %v291
          %306 = vst [vmem:[#allocation2 + $0x20] sm:$0xff] %v292
          %307 = vst [vmem:[#allocation2 + $0x28] sm:$0xff] %v293
          %vm308 = vcmask 130048
          %309 = vst.msk [vmem:[#allocation2 + $0x30] sm:$0xff] %vm308, %v294
          %310 = vst [vmem:[#allocation2 + $0x38] sm:$0xff] %v295
          %311 = vst [vmem:[#allocation2 + $0x40] sm:$0xff] %v296
          %312 = vst [vmem:[#allocation2 + $0x48] sm:$0xff] %v297
          %313 = vst [vmem:[#allocation2 + $0x50] sm:$0xff] %v298
          %314 = vst [vmem:[#allocation2 + $0x58] sm:$0xff] %v299
          %315 = vst [vmem:[#allocation2 + $0x60] sm:$0xff] %v300
          %316 = vst.msk [vmem:[#allocation2 + $0x68] sm:$0xff] %vm308, %v301
          %317 = vst [vmem:[%s269] sm:$0xff] %v276
          %318 = vst [vmem:[%s269 + $0x8] sm:$0xff] %v277
          %319 = vst [vmem:[%s269 + $0x10] sm:$0xff] %v278
          %vm320 = vcmask 125952
          %321 = vst.msk [vmem:[%s269 + $0x18] sm:$0xf] %vm320, %v279
          %322 = vst [vmem:[%s269 + $0x1c] sm:$0xff] %v280
          %323 = vst [vmem:[%s269 + $0x24] sm:$0xff] %v281
          %324 = vst [vmem:[%s269 + $0x2c] sm:$0xff] %v282
          %325 = vst.msk [vmem:[%s269 + $0x34] sm:$0xf] %vm320, %v283
        $region48: #{_scoring_sequence_padded.1} parent=31 // pred_fallthru
          _
        %p326 = scmp.gt.s32.totalorder %s29, 0
        // Predicated region
        $region49: #{_scoring_sequence_padded.1} parent=31 // pred_check
          %p327 = pneg %p326
        $region50: #{_scoring_sequence_padded.1} parent=31 // pred_check_branch
          %329 = sbr.rel (%p327) target = $region52
        $region51: #{_scoring_sequence_padded.1} parent=31 // pred_region
          %v330 = vld [vmem:[#allocation2] sm:$0xff]
          %v331 = vld [vmem:[#allocation2 + $0x8] sm:$0xff]
          %v332 = vld [vmem:[#allocation2 + $0x10] sm:$0xff]
          %v333 = vld [vmem:[#allocation2 + $0x18] sm:$0xff]
          %v334 = vld [vmem:[#allocation2 + $0x20] sm:$0xff]
          %v335 = vld [vmem:[#allocation2 + $0x28] sm:$0xff]
          %v336 = vld [vmem:[#allocation2 + $0x30] sm:$0xff]
          %v337 = vld [vmem:[#allocation2 + $0x38] sm:$0xff]
          %v338 = vld [vmem:[#allocation2 + $0x40] sm:$0xff]
          %v339 = vld [vmem:[#allocation2 + $0x48] sm:$0xff]
          %v340 = vld [vmem:[#allocation2 + $0x50] sm:$0xff]
          %v341 = vld [vmem:[#allocation2 + $0x58] sm:$0xff]
          %v342 = vld [vmem:[#allocation2 + $0x60] sm:$0xff]
          %v343 = vld [vmem:[#allocation2 + $0x68] sm:$0xff]
          %v344 = vld [vmem:[#allocation6] sm:$0xff]
          %v345 = vld [vmem:[#allocation6 + $0x8] sm:$0xff]
          %v346 = vld [vmem:[#allocation6 + $0x10] sm:$0xff]
          %v347 = vld [vmem:[#allocation6 + $0x18] sm:$0xff]
          %v348 = vld [vmem:[#allocation6 + $0x20] sm:$0xff]
          %v349 = vld [vmem:[#allocation6 + $0x28] sm:$0xff]
          %v350 = vld [vmem:[#allocation6 + $0x30] sm:$0xff]
          %v351 = vld [vmem:[#allocation6 + $0x38] sm:$0xff]
          %v352 = vld [vmem:[#allocation6 + $0x40] sm:$0xff]
          %v353 = vld [vmem:[#allocation6 + $0x48] sm:$0xff]
          %v354 = vld [vmem:[#allocation6 + $0x50] sm:$0xff]
          %v355 = vld [vmem:[#allocation6 + $0x58] sm:$0xff]
          %v356 = vld [vmem:[#allocation6 + $0x60] sm:$0xff]
          %v357 = vld [vmem:[#allocation6 + $0x68] sm:$0xff]
          %v358 = vld [vmem:[#allocation6 + $0x70] sm:$0xff]
          %v359 = vld [vmem:[#allocation6 + $0x78] sm:$0xff]
          %v360 = vld [vmem:[#allocation6 + $0x80] sm:$0xff]
          %v361 = vld [vmem:[#allocation6 + $0x88] sm:$0xff]
          %v362 = vld [vmem:[#allocation6 + $0x90] sm:$0xff]
          %v363 = vld [vmem:[#allocation6 + $0x98] sm:$0xff]
          %v364 = vld [vmem:[#allocation6 + $0xa0] sm:$0xff]
          %v365 = vld [vmem:[#allocation6 + $0xa8] sm:$0xff]
          %v366 = vld [vmem:[#allocation6 + $0xb0] sm:$0xff]
          %v367 = vld [vmem:[#allocation6 + $0xb8] sm:$0xff]
          %v368 = vld [vmem:[#allocation6 + $0xc0] sm:$0xff]
          %v369 = vld [vmem:[#allocation6 + $0xc8] sm:$0xff]
          %v370 = vld [vmem:[#allocation6 + $0xd0] sm:$0xff]
          %v371 = vld [vmem:[#allocation6 + $0xd8] sm:$0xff]
          %v372 = vld [vmem:[#allocation6 + $0xe0] sm:$0xff]
          %v373 = vld [vmem:[#allocation6 + $0xe8] sm:$0xff]
          %v374 = vld [vmem:[#allocation6 + $0xf0] sm:$0xff]
          %v375 = vld [vmem:[#allocation6 + $0xf8] sm:$0xff]
          %v376 = vld [vmem:[#allocation6 + $0x100] sm:$0xff]
          %v377 = vld [vmem:[#allocation6 + $0x108] sm:$0xff]
          %v378 = vld [vmem:[#allocation6 + $0x110] sm:$0xff]
          %v379 = vld [vmem:[#allocation6 + $0x118] sm:$0xff]
          %v380 = vld [vmem:[#allocation6 + $0x120] sm:$0xff]
          %v381 = vld [vmem:[#allocation6 + $0x128] sm:$0xff]
          %v382 = vld [vmem:[#allocation6 + $0x130] sm:$0xff]
          %v383 = vld [vmem:[#allocation6 + $0x138] sm:$0xff]
          %v384 = vld [vmem:[#allocation6 + $0x140] sm:$0xff]
          %v385 = vld [vmem:[#allocation6 + $0x148] sm:$0xff]
          %v386 = vld [vmem:[#allocation6 + $0x150] sm:$0xff]
          %v387 = vld [vmem:[#allocation6 + $0x158] sm:$0xff]
          %v388 = vld [vmem:[#allocation6 + $0x160] sm:$0xff]
          %v389 = vld [vmem:[#allocation6 + $0x168] sm:$0xff]
          %v390 = vld [vmem:[#allocation6 + $0x170] sm:$0xff]
          %v391 = vld [vmem:[#allocation6 + $0x178] sm:$0xff]
          %v392 = vld [vmem:[#allocation6 + $0x180] sm:$0xff]
          %v393 = vld [vmem:[#allocation6 + $0x188] sm:$0xff]
          %v394 = vld [vmem:[#allocation6 + $0x190] sm:$0xff]
          %v395 = vld [vmem:[#allocation6 + $0x198] sm:$0xff]
          %v396 = vld [vmem:[#allocation6 + $0x1a0] sm:$0xff]
          %v397 = vld [vmem:[#allocation6 + $0x1a8] sm:$0xff]
          %v398 = vld [vmem:[#allocation6 + $0x1b0] sm:$0xff]
          %v399 = vld [vmem:[#allocation6 + $0x1b8] sm:$0xff]
          %v400 = vld [vmem:[#allocation6 + $0x1c0] sm:$0xff]
          %v401 = vld [vmem:[#allocation6 + $0x1c8] sm:$0xff]
          %v402 = vld [vmem:[#allocation6 + $0x1d0] sm:$0xff]
          %v403 = vld [vmem:[#allocation6 + $0x1d8] sm:$0xff]
          %v404 = vld [vmem:[#allocation6 + $0x1e0] sm:$0xff]
          %v405 = vld [vmem:[#allocation6 + $0x1e8] sm:$0xff]
          %v406 = vld [vmem:[#allocation6 + $0x1f0] sm:$0xff]
          %v407 = vld [vmem:[#allocation6 + $0x1f8] sm:$0xff]
          %v408 = vld [vmem:[#allocation6 + $0x200] sm:$0xff]
          %v409 = vld [vmem:[#allocation6 + $0x208] sm:$0xff]
          %v410 = vld [vmem:[#allocation6 + $0x210] sm:$0xff]
          %v411 = vld [vmem:[#allocation6 + $0x218] sm:$0xff]
          %v412 = vld [vmem:[#allocation6 + $0x220] sm:$0xff]
          %v413 = vld [vmem:[#allocation6 + $0x228] sm:$0xff]
          %v414 = vld [vmem:[#allocation6 + $0x230] sm:$0xff]
          %v415 = vld [vmem:[#allocation6 + $0x238] sm:$0xff]
          %v416 = vld [vmem:[#allocation6 + $0x240] sm:$0xff]
          %v417 = vld [vmem:[#allocation6 + $0x248] sm:$0xff]
          %v418 = vld [vmem:[#allocation6 + $0x250] sm:$0xff]
          %v419 = vld [vmem:[#allocation6 + $0x258] sm:$0xff]
          %v420 = vld [vmem:[#allocation6 + $0x260] sm:$0xff]
          %v421 = vld [vmem:[#allocation6 + $0x268] sm:$0xff]
          %v422 = vld [vmem:[#allocation6 + $0x270] sm:$0xff]
          %v423 = vld [vmem:[#allocation6 + $0x278] sm:$0xff]
          %v424 = vld [vmem:[#allocation6 + $0x280] sm:$0xff]
          %v425 = vld [vmem:[#allocation6 + $0x288] sm:$0xff]
          %v426 = vld [vmem:[#allocation6 + $0x290] sm:$0xff]
          %v427 = vld [vmem:[#allocation6 + $0x298] sm:$0xff]
          %v428 = vld [vmem:[#allocation6 + $0x2a0] sm:$0xff]
          %v429 = vld [vmem:[#allocation6 + $0x2a8] sm:$0xff]
          %v430 = vld [vmem:[#allocation6 + $0x2b0] sm:$0xff]
          %v431 = vld [vmem:[#allocation6 + $0x2b8] sm:$0xff]
          %v432 = vld [vmem:[#allocation6 + $0x2c0] sm:$0xff]
          %v433 = vld [vmem:[#allocation6 + $0x2c8] sm:$0xff]
          %v434 = vld [vmem:[#allocation6 + $0x2d0] sm:$0xff]
          %v435 = vld [vmem:[#allocation6 + $0x2d8] sm:$0xff]
          %v436 = vld [vmem:[#allocation6 + $0x2e0] sm:$0xff]
          %v437 = vld [vmem:[#allocation6 + $0x2e8] sm:$0xff]
          %v438 = vld [vmem:[#allocation6 + $0x2f0] sm:$0xff]
          %v439 = vld [vmem:[#allocation6 + $0x2f8] sm:$0xff]
          %v440 = vld [vmem:[#allocation6 + $0x300] sm:$0xff]
          %v441 = vld [vmem:[#allocation6 + $0x308] sm:$0xff]
          %v442 = vld [vmem:[#allocation6 + $0x310] sm:$0xff]
          %v443 = vld [vmem:[#allocation6 + $0x318] sm:$0xff]
          %v444 = vld [vmem:[#allocation6 + $0x320] sm:$0xff]
          %v445 = vld [vmem:[#allocation6 + $0x328] sm:$0xff]
          %v446 = vld [vmem:[#allocation6 + $0x330] sm:$0xff]
          %v447 = vld [vmem:[#allocation6 + $0x338] sm:$0xff]
          %v448 = vld [vmem:[#allocation6 + $0x340] sm:$0xff]
          %v449 = vld [vmem:[#allocation6 + $0x348] sm:$0xff]
          %v450 = vld [vmem:[#allocation6 + $0x350] sm:$0xff]
          %v451 = vld [vmem:[#allocation6 + $0x358] sm:$0xff]
          %v452 = vld [vmem:[#allocation6 + $0x360] sm:$0xff]
          %v453 = vld [vmem:[#allocation6 + $0x368] sm:$0xff]
          %v454 = vld [vmem:[#allocation6 + $0x370] sm:$0xff]
          %v455 = vld [vmem:[#allocation6 + $0x378] sm:$0xff]
          %v456 = vld [vmem:[#allocation6 + $0x380] sm:$0xff]
          %v457 = vld [vmem:[#allocation6 + $0x388] sm:$0xff]
          %v458 = vld [vmem:[#allocation6 + $0x390] sm:$0xff]
          %v459 = vld [vmem:[#allocation6 + $0x398] sm:$0xff]
          %v460 = vld [vmem:[#allocation6 + $0x3a0] sm:$0xff]
          %v461 = vld [vmem:[#allocation6 + $0x3a8] sm:$0xff]
          %v462 = vld [vmem:[#allocation6 + $0x3b0] sm:$0xff]
          %v463 = vld [vmem:[#allocation6 + $0x3b8] sm:$0xff]
          %v464 = vld [vmem:[#allocation6 + $0x3c0] sm:$0xff]
          %v465 = vld [vmem:[#allocation6 + $0x3c8] sm:$0xff]
          %v466 = vld [vmem:[#allocation6 + $0x3d0] sm:$0xff]
          %v467 = vld [vmem:[#allocation6 + $0x3d8] sm:$0xff]
          %v468 = vld [vmem:[#allocation6 + $0x3e0] sm:$0xff]
          %v469 = vld [vmem:[#allocation6 + $0x3e8] sm:$0xff]
          %v470 = vld [vmem:[#allocation6 + $0x3f0] sm:$0xff]
          %v471 = vld [vmem:[#allocation6 + $0x3f8] sm:$0xff]
          %v472 = vld [vmem:[#allocation6 + $0x400] sm:$0xff]
          %v473 = vld [vmem:[#allocation6 + $0x408] sm:$0xff]
          %v474 = vld [vmem:[#allocation6 + $0x410] sm:$0xff]
          %v475 = vld [vmem:[#allocation6 + $0x418] sm:$0xff]
          %v476 = vld [vmem:[#allocation6 + $0x420] sm:$0xff]
          %v477 = vld [vmem:[#allocation6 + $0x428] sm:$0xff]
          %v478 = vld [vmem:[#allocation6 + $0x430] sm:$0xff]
          %v479 = vld [vmem:[#allocation6 + $0x438] sm:$0xff]
          %v480 = vld [vmem:[#allocation6 + $0x440] sm:$0xff]
          %v481 = vld [vmem:[#allocation6 + $0x448] sm:$0xff]
          %v482 = vld [vmem:[#allocation6 + $0x450] sm:$0xff]
          %v483 = vld [vmem:[#allocation6 + $0x458] sm:$0xff]
          %v484 = vld [vmem:[#allocation6 + $0x460] sm:$0xff]
          %v485 = vld [vmem:[#allocation6 + $0x468] sm:$0xff]
          %v486 = vld [vmem:[#allocation6 + $0x470] sm:$0xff]
          %v487 = vld [vmem:[#allocation6 + $0x478] sm:$0xff]
          %v488 = vld [vmem:[#allocation6 + $0x480] sm:$0xff]
          %v489 = vld [vmem:[#allocation6 + $0x488] sm:$0xff]
          %v490 = vld [vmem:[#allocation6 + $0x490] sm:$0xff]
          %v491 = vld [vmem:[#allocation6 + $0x498] sm:$0xff]
          %v492 = vld [vmem:[#allocation6 + $0x4a0] sm:$0xff]
          %v493 = vld [vmem:[#allocation6 + $0x4a8] sm:$0xff]
          %v494 = vld [vmem:[#allocation6 + $0x4b0] sm:$0xff]
          %v495 = vld [vmem:[#allocation6 + $0x4b8] sm:$0xff]
          %v496 = vld [vmem:[#allocation6 + $0x4c0] sm:$0xff]
          %v497 = vld [vmem:[#allocation6 + $0x4c8] sm:$0xff]
          %v498 = vld [vmem:[#allocation6 + $0x4d0] sm:$0xff]
          %v499 = vld [vmem:[#allocation6 + $0x4d8] sm:$0xff]
          %v500 = vld [vmem:[#allocation6 + $0x4e0] sm:$0xff]
          %v501 = vld [vmem:[#allocation6 + $0x4e8] sm:$0xff]
          %v502 = vld [vmem:[#allocation6 + $0x4f0] sm:$0xff]
          %v503 = vld [vmem:[#allocation6 + $0x4f8] sm:$0xff]
          %v504 = vld [vmem:[#allocation6 + $0x500] sm:$0xff]
          %v505 = vld [vmem:[#allocation6 + $0x508] sm:$0xff]
          %v506 = vld [vmem:[#allocation6 + $0x510] sm:$0xff]
          %v507 = vld [vmem:[#allocation6 + $0x518] sm:$0xff]
          %v508 = vld [vmem:[#allocation6 + $0x520] sm:$0xff]
          %v509 = vld [vmem:[#allocation6 + $0x528] sm:$0xff]
          %v510 = vld [vmem:[#allocation6 + $0x530] sm:$0xff]
          %v511 = vld [vmem:[#allocation6 + $0x538] sm:$0xff]
          %v512 = vld [vmem:[#allocation6 + $0x540] sm:$0xff]
          %v513 = vld [vmem:[#allocation6 + $0x548] sm:$0xff]
          %v514 = vld [vmem:[#allocation6 + $0x550] sm:$0xff]
          %v515 = vld [vmem:[#allocation6 + $0x558] sm:$0xff]
          %v516 = vld [vmem:[#allocation6 + $0x560] sm:$0xff]
          %v517 = vld [vmem:[#allocation6 + $0x568] sm:$0xff]
          %v518 = vld [vmem:[#allocation6 + $0x570] sm:$0xff]
          %v519 = vld [vmem:[#allocation6 + $0x578] sm:$0xff]
          %v520 = vld [vmem:[#allocation6 + $0x580] sm:$0xff]
          %v521 = vld [vmem:[#allocation6 + $0x588] sm:$0xff]
          %v522 = vld [vmem:[#allocation6 + $0x590] sm:$0xff]
          %v523 = vld [vmem:[#allocation6 + $0x598] sm:$0xff]
          %v524 = vld [vmem:[#allocation6 + $0x5a0] sm:$0xff]
          %v525 = vld [vmem:[#allocation6 + $0x5a8] sm:$0xff]
          %v526 = vld [vmem:[#allocation6 + $0x5b0] sm:$0xff]
          %v527 = vld [vmem:[#allocation6 + $0x5b8] sm:$0xff]
          %v528 = vld [vmem:[#allocation6 + $0x5c0] sm:$0xff]
          %v529 = vld [vmem:[#allocation6 + $0x5c8] sm:$0xff]
          %v530 = vld [vmem:[#allocation6 + $0x5d0] sm:$0xff]
          %v531 = vld [vmem:[#allocation6 + $0x5d8] sm:$0xff]
          %v532 = vld [vmem:[#allocation6 + $0x5e0] sm:$0xff]
          %v533 = vld [vmem:[#allocation6 + $0x5e8] sm:$0xff]
          %v534 = vld [vmem:[#allocation6 + $0x5f0] sm:$0xff]
          %v535 = vld [vmem:[#allocation6 + $0x5f8] sm:$0xff]
          %v536 = vld [vmem:[#allocation6 + $0x600] sm:$0xff]
          %v537 = vld [vmem:[#allocation6 + $0x608] sm:$0xff]
          %v538 = vld [vmem:[#allocation6 + $0x610] sm:$0xff]
          %v539 = vld [vmem:[#allocation6 + $0x618] sm:$0xff]
          %v540 = vpack.c.bf16 %v337, %v330
          %v541 = vpack.c.bf16 %v338, %v331
          %v542 = vpack.c.bf16 %v339, %v332
          %v543 = vpack.c.bf16 %v340, %v333
          %v544 = vpack.c.bf16 %v341, %v334
          %v545 = vpack.c.bf16 %v342, %v335
          %v546 = vpack.c.bf16 %v343, %v336
          %v547 = vld [vmem:[#allocation8] sm:$0xf]
          %v549 = vperm.slane %v547, 0
          %v550 = vperm.slane %v547, 1
          %v551 = vperm.slane %v547, 2
          %v552 = vperm.slane %v547, 3
          %v753 = vunpack.c.l.b16 %v344
          %v754 = vunpack.c.h.b16 %v344
          %v755 = vunpack.c.l.b16 %v345
          %v756 = vunpack.c.h.b16 %v345
          %v757 = vunpack.c.l.b16 %v346
          %v758 = vunpack.c.h.b16 %v346
          %v759 = vunpack.c.l.b16 %v347
          %v760 = vunpack.c.h.b16 %v347
          %v761 = vunpack.c.l.b16 %v348
          %v762 = vunpack.c.h.b16 %v348
          %v763 = vunpack.c.l.b16 %v349
          %v764 = vunpack.c.h.b16 %v349
          %v765 = vunpack.c.l.b16 %v350
          %v766 = vunpack.c.h.b16 %v350
          %v767 = vunpack.c.l.b16 %v351
          %v768 = vunpack.c.h.b16 %v351
          %v769 = vunpack.c.l.b16 %v352
          %v770 = vunpack.c.h.b16 %v352
          %v771 = vunpack.c.l.b16 %v353
          %v772 = vunpack.c.h.b16 %v353
          %v773 = vunpack.c.l.b16 %v354
          %v774 = vunpack.c.h.b16 %v354
          %v775 = vunpack.c.l.b16 %v355
          %v776 = vunpack.c.h.b16 %v355
          %v777 = vunpack.c.l.b16 %v356
          %v778 = vunpack.c.h.b16 %v356
          %v779 = vunpack.c.l.b16 %v357
          %v780 = vunpack.c.h.b16 %v357
          %v781 = vunpack.c.l.b16 %v358
          %v782 = vunpack.c.h.b16 %v358
          %v783 = vunpack.c.l.b16 %v359
          %v784 = vunpack.c.h.b16 %v359
          %v785 = vunpack.c.l.b16 %v360
          %v786 = vunpack.c.h.b16 %v360
          %v787 = vunpack.c.l.b16 %v361
          %v788 = vunpack.c.h.b16 %v361
          %v789 = vunpack.c.l.b16 %v362
          %v790 = vunpack.c.h.b16 %v362
          %v791 = vunpack.c.l.b16 %v363
          %v792 = vunpack.c.h.b16 %v363
          %v793 = vunpack.c.l.b16 %v364
          %v794 = vunpack.c.h.b16 %v364
          %v795 = vunpack.c.l.b16 %v365
          %v796 = vunpack.c.h.b16 %v365
          %v797 = vunpack.c.l.b16 %v366
          %v798 = vunpack.c.h.b16 %v366
          %v799 = vunpack.c.l.b16 %v367
          %v800 = vunpack.c.h.b16 %v367
          %v801 = vunpack.c.l.b16 %v368
          %v802 = vunpack.c.h.b16 %v368
          %v803 = vunpack.c.l.b16 %v369
          %v804 = vunpack.c.h.b16 %v369
          %v805 = vunpack.c.l.b16 %v370
          %v806 = vunpack.c.h.b16 %v370
          %v807 = vunpack.c.l.b16 %v371
          %v808 = vunpack.c.h.b16 %v371
          %v809 = vunpack.c.l.b16 %v372
          %v810 = vunpack.c.h.b16 %v372
          %v811 = vunpack.c.l.b16 %v373
          %v812 = vunpack.c.h.b16 %v373
          %v813 = vunpack.c.l.b16 %v374
          %v814 = vunpack.c.h.b16 %v374
          %v815 = vunpack.c.l.b16 %v375
          %v816 = vunpack.c.h.b16 %v375
          %v817 = vunpack.c.l.b16 %v376
          %v818 = vunpack.c.h.b16 %v376
          %v819 = vunpack.c.l.b16 %v377
          %v820 = vunpack.c.h.b16 %v377
          %v821 = vunpack.c.l.b16 %v378
          %v822 = vunpack.c.h.b16 %v378
          %v823 = vunpack.c.l.b16 %v379
          %v824 = vunpack.c.h.b16 %v379
          %v825 = vunpack.c.l.b16 %v380
          %v826 = vunpack.c.h.b16 %v380
          %v827 = vunpack.c.l.b16 %v381
          %v828 = vunpack.c.h.b16 %v381
          %v829 = vunpack.c.l.b16 %v382
          %v830 = vunpack.c.h.b16 %v382
          %v831 = vunpack.c.l.b16 %v383
          %v832 = vunpack.c.h.b16 %v383
          %v833 = vunpack.c.l.b16 %v384
          %v834 = vunpack.c.h.b16 %v384
          %v835 = vunpack.c.l.b16 %v385
          %v836 = vunpack.c.h.b16 %v385
          %v837 = vunpack.c.l.b16 %v386
          %v838 = vunpack.c.h.b16 %v386
          %v839 = vunpack.c.l.b16 %v387
          %v840 = vunpack.c.h.b16 %v387
          %v841 = vunpack.c.l.b16 %v388
          %v842 = vunpack.c.h.b16 %v388
          %v843 = vunpack.c.l.b16 %v389
          %v844 = vunpack.c.h.b16 %v389
          %v845 = vunpack.c.l.b16 %v390
          %v846 = vunpack.c.h.b16 %v390
          %v847 = vunpack.c.l.b16 %v391
          %v848 = vunpack.c.h.b16 %v391
          %v849 = vunpack.c.l.b16 %v392
          %v850 = vunpack.c.h.b16 %v392
          %v851 = vunpack.c.l.b16 %v393
          %v852 = vunpack.c.h.b16 %v393
          %v853 = vunpack.c.l.b16 %v394
          %v854 = vunpack.c.h.b16 %v394
          %v855 = vunpack.c.l.b16 %v395
          %v856 = vunpack.c.h.b16 %v395
          %v857 = vunpack.c.l.b16 %v396
          %v858 = vunpack.c.h.b16 %v396
          %v859 = vunpack.c.l.b16 %v397
          %v860 = vunpack.c.h.b16 %v397
          %v861 = vunpack.c.l.b16 %v398
          %v862 = vunpack.c.h.b16 %v398
          %v863 = vunpack.c.l.b16 %v399
          %v864 = vunpack.c.h.b16 %v399
          %v865 = vunpack.c.l.b16 %v400
          %v866 = vunpack.c.h.b16 %v400
          %v867 = vunpack.c.l.b16 %v401
          %v868 = vunpack.c.h.b16 %v401
          %v869 = vunpack.c.l.b16 %v402
          %v870 = vunpack.c.h.b16 %v402
          %v871 = vunpack.c.l.b16 %v403
          %v872 = vunpack.c.h.b16 %v403
          %v873 = vunpack.c.l.b16 %v404
          %v874 = vunpack.c.h.b16 %v404
          %v875 = vunpack.c.l.b16 %v405
          %v876 = vunpack.c.h.b16 %v405
          %v877 = vunpack.c.l.b16 %v406
          %v878 = vunpack.c.h.b16 %v406
          %v879 = vunpack.c.l.b16 %v407
          %v880 = vunpack.c.h.b16 %v407
          %v881 = vunpack.c.l.b16 %v408
          %v882 = vunpack.c.h.b16 %v408
          %v883 = vunpack.c.l.b16 %v409
          %v884 = vunpack.c.h.b16 %v409
          %v885 = vunpack.c.l.b16 %v410
          %v886 = vunpack.c.h.b16 %v410
          %v887 = vunpack.c.l.b16 %v411
          %v888 = vunpack.c.h.b16 %v411
          %v889 = vunpack.c.l.b16 %v412
          %v890 = vunpack.c.h.b16 %v412
          %v891 = vunpack.c.l.b16 %v413
          %v892 = vunpack.c.h.b16 %v413
          %v893 = vunpack.c.l.b16 %v414
          %v894 = vunpack.c.h.b16 %v414
          %v895 = vunpack.c.l.b16 %v415
          %v896 = vunpack.c.h.b16 %v415
          %v897 = vunpack.c.l.b16 %v416
          %v898 = vunpack.c.h.b16 %v416
          %v899 = vunpack.c.l.b16 %v417
          %v900 = vunpack.c.h.b16 %v417
          %v901 = vunpack.c.l.b16 %v418
          %v902 = vunpack.c.h.b16 %v418
          %v903 = vunpack.c.l.b16 %v419
          %v904 = vunpack.c.h.b16 %v419
          %v905 = vunpack.c.l.b16 %v420
          %v906 = vunpack.c.h.b16 %v420
          %v907 = vunpack.c.l.b16 %v421
          %v908 = vunpack.c.h.b16 %v421
          %v909 = vunpack.c.l.b16 %v422
          %v910 = vunpack.c.h.b16 %v422
          %v911 = vunpack.c.l.b16 %v423
          %v912 = vunpack.c.h.b16 %v423
          %v913 = vunpack.c.l.b16 %v424
          %v914 = vunpack.c.h.b16 %v424
          %v915 = vunpack.c.l.b16 %v425
          %v916 = vunpack.c.h.b16 %v425
          %v917 = vunpack.c.l.b16 %v426
          %v918 = vunpack.c.h.b16 %v426
          %v919 = vunpack.c.l.b16 %v427
          %v920 = vunpack.c.h.b16 %v427
          %v921 = vunpack.c.l.b16 %v428
          %v922 = vunpack.c.h.b16 %v428
          %v923 = vunpack.c.l.b16 %v429
          %v924 = vunpack.c.h.b16 %v429
          %v925 = vunpack.c.l.b16 %v430
          %v926 = vunpack.c.h.b16 %v430
          %v927 = vunpack.c.l.b16 %v431
          %v928 = vunpack.c.h.b16 %v431
          %v929 = vunpack.c.l.b16 %v432
          %v930 = vunpack.c.h.b16 %v432
          %v931 = vunpack.c.l.b16 %v433
          %v932 = vunpack.c.h.b16 %v433
          %v933 = vunpack.c.l.b16 %v434
          %v934 = vunpack.c.h.b16 %v434
          %v935 = vunpack.c.l.b16 %v435
          %v936 = vunpack.c.h.b16 %v435
          %v937 = vunpack.c.l.b16 %v436
          %v938 = vunpack.c.h.b16 %v436
          %v939 = vunpack.c.l.b16 %v437
          %v940 = vunpack.c.h.b16 %v437
          %v941 = vunpack.c.l.b16 %v438
          %v942 = vunpack.c.h.b16 %v438
          %v943 = vunpack.c.l.b16 %v439
          %v944 = vunpack.c.h.b16 %v439
          %v945 = vunpack.c.l.b16 %v440
          %v946 = vunpack.c.h.b16 %v440
          %v947 = vunpack.c.l.b16 %v441
          %v948 = vunpack.c.h.b16 %v441
          %v949 = vunpack.c.l.b16 %v442
          %v950 = vunpack.c.h.b16 %v442
          %v951 = vunpack.c.l.b16 %v443
          %v952 = vunpack.c.h.b16 %v443
          %v953 = vunpack.c.l.b16 %v444
          %v954 = vunpack.c.h.b16 %v444
          %v955 = vunpack.c.l.b16 %v445
          %v956 = vunpack.c.h.b16 %v445
          %v957 = vunpack.c.l.b16 %v446
          %v958 = vunpack.c.h.b16 %v446
          %v959 = vunpack.c.l.b16 %v447
          %v960 = vunpack.c.h.b16 %v447
          %v961 = vunpack.c.l.b16 %v448
          %v962 = vunpack.c.h.b16 %v448
          %v963 = vunpack.c.l.b16 %v449
          %v964 = vunpack.c.h.b16 %v449
          %v965 = vunpack.c.l.b16 %v450
          %v966 = vunpack.c.h.b16 %v450
          %v967 = vunpack.c.l.b16 %v451
          %v968 = vunpack.c.h.b16 %v451
          %v969 = vunpack.c.l.b16 %v452
          %v970 = vunpack.c.h.b16 %v452
          %v971 = vunpack.c.l.b16 %v453
          %v972 = vunpack.c.h.b16 %v453
          %v973 = vunpack.c.l.b16 %v454
          %v974 = vunpack.c.h.b16 %v454
          %v975 = vunpack.c.l.b16 %v455
          %v976 = vunpack.c.h.b16 %v455
          %v977 = vunpack.c.l.b16 %v456
          %v978 = vunpack.c.h.b16 %v456
          %v979 = vunpack.c.l.b16 %v457
          %v980 = vunpack.c.h.b16 %v457
          %v981 = vunpack.c.l.b16 %v458
          %v982 = vunpack.c.h.b16 %v458
          %v983 = vunpack.c.l.b16 %v459
          %v984 = vunpack.c.h.b16 %v459
          %v985 = vunpack.c.l.b16 %v460
          %v986 = vunpack.c.h.b16 %v460
          %v987 = vunpack.c.l.b16 %v461
          %v988 = vunpack.c.h.b16 %v461
          %v989 = vunpack.c.l.b16 %v462
          %v990 = vunpack.c.h.b16 %v462
          %v991 = vunpack.c.l.b16 %v463
          %v992 = vunpack.c.h.b16 %v463
          %v993 = vunpack.c.l.b16 %v464
          %v994 = vunpack.c.h.b16 %v464
          %v995 = vunpack.c.l.b16 %v465
          %v996 = vunpack.c.h.b16 %v465
          %v997 = vunpack.c.l.b16 %v466
          %v998 = vunpack.c.h.b16 %v466
          %v999 = vunpack.c.l.b16 %v467
          %v1000 = vunpack.c.h.b16 %v467
          %v1001 = vunpack.c.l.b16 %v468
          %v1002 = vunpack.c.h.b16 %v468
          %v1003 = vunpack.c.l.b16 %v469
          %v1004 = vunpack.c.h.b16 %v469
          %v1005 = vunpack.c.l.b16 %v470
          %v1006 = vunpack.c.h.b16 %v470
          %v1007 = vunpack.c.l.b16 %v471
          %v1008 = vunpack.c.h.b16 %v471
          %v1009 = vunpack.c.l.b16 %v472
          %v1010 = vunpack.c.h.b16 %v472
          %v1011 = vunpack.c.l.b16 %v473
          %v1012 = vunpack.c.h.b16 %v473
          %v1013 = vunpack.c.l.b16 %v474
          %v1014 = vunpack.c.h.b16 %v474
          %v1015 = vunpack.c.l.b16 %v475
          %v1016 = vunpack.c.h.b16 %v475
          %v1017 = vunpack.c.l.b16 %v476
          %v1018 = vunpack.c.h.b16 %v476
          %v1019 = vunpack.c.l.b16 %v477
          %v1020 = vunpack.c.h.b16 %v477
          %v1021 = vunpack.c.l.b16 %v478
          %v1022 = vunpack.c.h.b16 %v478
          %v1023 = vunpack.c.l.b16 %v479
          %v1024 = vunpack.c.h.b16 %v479
          %v1025 = vunpack.c.l.b16 %v480
          %v1026 = vunpack.c.h.b16 %v480
          %v1027 = vunpack.c.l.b16 %v481
          %v1028 = vunpack.c.h.b16 %v481
          %v1029 = vunpack.c.l.b16 %v482
          %v1030 = vunpack.c.h.b16 %v482
          %v1031 = vunpack.c.l.b16 %v483
          %v1032 = vunpack.c.h.b16 %v483
          %v1033 = vunpack.c.l.b16 %v484
          %v1034 = vunpack.c.h.b16 %v484
          %v1035 = vunpack.c.l.b16 %v485
          %v1036 = vunpack.c.h.b16 %v485
          %v1037 = vunpack.c.l.b16 %v486
          %v1038 = vunpack.c.h.b16 %v486
          %v1039 = vunpack.c.l.b16 %v487
          %v1040 = vunpack.c.h.b16 %v487
          %v1041 = vunpack.c.l.b16 %v488
          %v1042 = vunpack.c.h.b16 %v488
          %v1043 = vunpack.c.l.b16 %v489
          %v1044 = vunpack.c.h.b16 %v489
          %v1045 = vunpack.c.l.b16 %v490
          %v1046 = vunpack.c.h.b16 %v490
          %v1047 = vunpack.c.l.b16 %v491
          %v1048 = vunpack.c.h.b16 %v491
          %v1049 = vunpack.c.l.b16 %v492
          %v1050 = vunpack.c.h.b16 %v492
          %v1051 = vunpack.c.l.b16 %v493
          %v1052 = vunpack.c.h.b16 %v493
          %v1053 = vunpack.c.l.b16 %v494
          %v1054 = vunpack.c.h.b16 %v494
          %v1055 = vunpack.c.l.b16 %v495
          %v1056 = vunpack.c.h.b16 %v495
          %v1057 = vunpack.c.l.b16 %v496
          %v1058 = vunpack.c.h.b16 %v496
          %v1059 = vunpack.c.l.b16 %v497
          %v1060 = vunpack.c.h.b16 %v497
          %v1061 = vunpack.c.l.b16 %v498
          %v1062 = vunpack.c.h.b16 %v498
          %v1063 = vunpack.c.l.b16 %v499
          %v1064 = vunpack.c.h.b16 %v499
          %v1065 = vunpack.c.l.b16 %v500
          %v1066 = vunpack.c.h.b16 %v500
          %v1067 = vunpack.c.l.b16 %v501
          %v1068 = vunpack.c.h.b16 %v501
          %v1069 = vunpack.c.l.b16 %v502
          %v1070 = vunpack.c.h.b16 %v502
          %v1071 = vunpack.c.l.b16 %v503
          %v1072 = vunpack.c.h.b16 %v503
          %v1073 = vunpack.c.l.b16 %v504
          %v1074 = vunpack.c.h.b16 %v504
          %v1075 = vunpack.c.l.b16 %v505
          %v1076 = vunpack.c.h.b16 %v505
          %v1077 = vunpack.c.l.b16 %v506
          %v1078 = vunpack.c.h.b16 %v506
          %v1079 = vunpack.c.l.b16 %v507
          %v1080 = vunpack.c.h.b16 %v507
          %v1081 = vunpack.c.l.b16 %v508
          %v1082 = vunpack.c.h.b16 %v508
          %v1083 = vunpack.c.l.b16 %v509
          %v1084 = vunpack.c.h.b16 %v509
          %v1085 = vunpack.c.l.b16 %v510
          %v1086 = vunpack.c.h.b16 %v510
          %v1087 = vunpack.c.l.b16 %v511
          %v1088 = vunpack.c.h.b16 %v511
          %v1089 = vunpack.c.l.b16 %v512
          %v1090 = vunpack.c.h.b16 %v512
          %v1091 = vunpack.c.l.b16 %v513
          %v1092 = vunpack.c.h.b16 %v513
          %v1093 = vunpack.c.l.b16 %v514
          %v1094 = vunpack.c.h.b16 %v514
          %v1095 = vunpack.c.l.b16 %v515
          %v1096 = vunpack.c.h.b16 %v515
          %v1097 = vunpack.c.l.b16 %v516
          %v1098 = vunpack.c.h.b16 %v516
          %v1099 = vunpack.c.l.b16 %v517
          %v1100 = vunpack.c.h.b16 %v517
          %v1101 = vunpack.c.l.b16 %v518
          %v1102 = vunpack.c.h.b16 %v518
          %v1103 = vunpack.c.l.b16 %v519
          %v1104 = vunpack.c.h.b16 %v519
          %v1105 = vunpack.c.l.b16 %v520
          %v1106 = vunpack.c.h.b16 %v520
          %v1107 = vunpack.c.l.b16 %v521
          %v1108 = vunpack.c.h.b16 %v521
          %v1109 = vunpack.c.l.b16 %v522
          %v1110 = vunpack.c.h.b16 %v522
          %v1111 = vunpack.c.l.b16 %v523
          %v1112 = vunpack.c.h.b16 %v523
          %v1113 = vunpack.c.l.b16 %v524
          %v1114 = vunpack.c.h.b16 %v524
          %v1115 = vunpack.c.l.b16 %v525
          %v1116 = vunpack.c.h.b16 %v525
          %v1117 = vunpack.c.l.b16 %v526
          %v1118 = vunpack.c.h.b16 %v526
          %v1119 = vunpack.c.l.b16 %v527
          %v1120 = vunpack.c.h.b16 %v527
          %v1121 = vunpack.c.l.b16 %v528
          %v1122 = vunpack.c.h.b16 %v528
          %v1123 = vunpack.c.l.b16 %v529
          %v1124 = vunpack.c.h.b16 %v529
          %v1125 = vunpack.c.l.b16 %v530
          %v1126 = vunpack.c.h.b16 %v530
          %v1127 = vunpack.c.l.b16 %v531
          %v1128 = vunpack.c.h.b16 %v531
          %v1129 = vunpack.c.l.b16 %v532
          %v1130 = vunpack.c.h.b16 %v532
          %v1131 = vunpack.c.l.b16 %v533
          %v1132 = vunpack.c.h.b16 %v533
          %v1133 = vunpack.c.l.b16 %v534
          %v1134 = vunpack.c.h.b16 %v534
          %v1135 = vunpack.c.l.b16 %v535
          %v1136 = vunpack.c.h.b16 %v535
          %v1137 = vunpack.c.l.b16 %v536
          %v1138 = vunpack.c.h.b16 %v536
          %v1139 = vunpack.c.l.b16 %v537
          %v1140 = vunpack.c.h.b16 %v537
          %v1141 = vunpack.c.l.b16 %v538
          %v1142 = vunpack.c.h.b16 %v538
          %v1143 = vunpack.c.l.b16 %v539
          %v1144 = vunpack.c.h.b16 %v539
          %v1145 = vpack.c.b16 %v757, %v753
          %v1146 = vpack.c.b16 %v758, %v754
          %v1147 = vpack.c.b16 %v759, %v755
          %v1148 = vpack.c.b16 %v760, %v756
          %v1149 = vpack.c.b16 %v765, %v761
          %v1150 = vpack.c.b16 %v766, %v762
          %v1151 = vpack.c.b16 %v767, %v763
          %v1152 = vpack.c.b16 %v768, %v764
          %v1153 = vpack.c.b16 %v773, %v769
          %v1154 = vpack.c.b16 %v774, %v770
          %v1155 = vpack.c.b16 %v775, %v771
          %v1156 = vpack.c.b16 %v776, %v772
          %v1157 = vpack.c.b16 %v781, %v777
          %v1158 = vpack.c.b16 %v782, %v778
          %v1159 = vpack.c.b16 %v783, %v779
          %v1160 = vpack.c.b16 %v784, %v780
          %v1161 = vpack.c.b16 %v789, %v785
          %v1162 = vpack.c.b16 %v790, %v786
          %v1163 = vpack.c.b16 %v791, %v787
          %v1164 = vpack.c.b16 %v792, %v788
          %v1165 = vpack.c.b16 %v797, %v793
          %v1166 = vpack.c.b16 %v798, %v794
          %v1167 = vpack.c.b16 %v799, %v795
          %v1168 = vpack.c.b16 %v800, %v796
          %v1169 = vpack.c.b16 %v805, %v801
          %v1170 = vpack.c.b16 %v806, %v802
          %v1171 = vpack.c.b16 %v807, %v803
          %v1172 = vpack.c.b16 %v808, %v804
          %v1173 = vpack.c.b16 %v813, %v809
          %v1174 = vpack.c.b16 %v814, %v810
          %v1175 = vpack.c.b16 %v815, %v811
          %v1176 = vpack.c.b16 %v816, %v812
          %v1177 = vpack.c.b16 %v821, %v817
          %v1178 = vpack.c.b16 %v822, %v818
          %v1179 = vpack.c.b16 %v823, %v819
          %v1180 = vpack.c.b16 %v824, %v820
          %v1181 = vpack.c.b16 %v829, %v825
          %v1182 = vpack.c.b16 %v830, %v826
          %v1183 = vpack.c.b16 %v831, %v827
          %v1184 = vpack.c.b16 %v832, %v828
          %v1185 = vpack.c.b16 %v837, %v833
          %v1186 = vpack.c.b16 %v838, %v834
          %v1187 = vpack.c.b16 %v839, %v835
          %v1188 = vpack.c.b16 %v840, %v836
          %v1189 = vpack.c.b16 %v845, %v841
          %v1190 = vpack.c.b16 %v846, %v842
          %v1191 = vpack.c.b16 %v847, %v843
          %v1192 = vpack.c.b16 %v848, %v844
          %v1193 = vpack.c.b16 %v853, %v849
          %v1194 = vpack.c.b16 %v854, %v850
          %v1195 = vpack.c.b16 %v855, %v851
          %v1196 = vpack.c.b16 %v856, %v852
          %v1197 = vpack.c.b16 %v861, %v857
          %v1198 = vpack.c.b16 %v862, %v858
          %v1199 = vpack.c.b16 %v863, %v859
          %v1200 = vpack.c.b16 %v864, %v860
          %v1201 = vpack.c.b16 %v869, %v865
          %v1202 = vpack.c.b16 %v870, %v866
          %v1203 = vpack.c.b16 %v871, %v867
          %v1204 = vpack.c.b16 %v872, %v868
          %v1205 = vpack.c.b16 %v877, %v873
          %v1206 = vpack.c.b16 %v878, %v874
          %v1207 = vpack.c.b16 %v879, %v875
          %v1208 = vpack.c.b16 %v880, %v876
          %v1209 = vpack.c.b16 %v885, %v881
          %v1210 = vpack.c.b16 %v886, %v882
          %v1211 = vpack.c.b16 %v887, %v883
          %v1212 = vpack.c.b16 %v888, %v884
          %v1213 = vpack.c.b16 %v893, %v889
          %v1214 = vpack.c.b16 %v894, %v890
          %v1215 = vpack.c.b16 %v895, %v891
          %v1216 = vpack.c.b16 %v896, %v892
          %v1217 = vpack.c.b16 %v901, %v897
          %v1218 = vpack.c.b16 %v902, %v898
          %v1219 = vpack.c.b16 %v903, %v899
          %v1220 = vpack.c.b16 %v904, %v900
          %v1221 = vpack.c.b16 %v909, %v905
          %v1222 = vpack.c.b16 %v910, %v906
          %v1223 = vpack.c.b16 %v911, %v907
          %v1224 = vpack.c.b16 %v912, %v908
          %v1225 = vpack.c.b16 %v917, %v913
          %v1226 = vpack.c.b16 %v918, %v914
          %v1227 = vpack.c.b16 %v919, %v915
          %v1228 = vpack.c.b16 %v920, %v916
          %v1229 = vpack.c.b16 %v925, %v921
          %v1230 = vpack.c.b16 %v926, %v922
          %v1231 = vpack.c.b16 %v927, %v923
          %v1232 = vpack.c.b16 %v928, %v924
          %v1233 = vpack.c.b16 %v933, %v929
          %v1234 = vpack.c.b16 %v934, %v930
          %v1235 = vpack.c.b16 %v935, %v931
          %v1236 = vpack.c.b16 %v936, %v932
          %v1237 = vpack.c.b16 %v941, %v937
          %v1238 = vpack.c.b16 %v942, %v938
          %v1239 = vpack.c.b16 %v943, %v939
          %v1240 = vpack.c.b16 %v944, %v940
          %v1241 = vpack.c.b16 %v949, %v945
          %v1242 = vpack.c.b16 %v950, %v946
          %v1243 = vpack.c.b16 %v951, %v947
          %v1244 = vpack.c.b16 %v952, %v948
          %v1245 = vpack.c.b16 %v957, %v953
          %v1246 = vpack.c.b16 %v958, %v954
          %v1247 = vpack.c.b16 %v959, %v955
          %v1248 = vpack.c.b16 %v960, %v956
          %v1249 = vpack.c.b16 %v965, %v961
          %v1250 = vpack.c.b16 %v966, %v962
          %v1251 = vpack.c.b16 %v967, %v963
          %v1252 = vpack.c.b16 %v968, %v964
          %v1253 = vpack.c.b16 %v973, %v969
          %v1254 = vpack.c.b16 %v974, %v970
          %v1255 = vpack.c.b16 %v975, %v971
          %v1256 = vpack.c.b16 %v976, %v972
          %v1257 = vpack.c.b16 %v981, %v977
          %v1258 = vpack.c.b16 %v982, %v978
          %v1259 = vpack.c.b16 %v983, %v979
          %v1260 = vpack.c.b16 %v984, %v980
          %v1261 = vpack.c.b16 %v989, %v985
          %v1262 = vpack.c.b16 %v990, %v986
          %v1263 = vpack.c.b16 %v991, %v987
          %v1264 = vpack.c.b16 %v992, %v988
          %v1265 = vpack.c.b16 %v997, %v993
          %v1266 = vpack.c.b16 %v998, %v994
          %v1267 = vpack.c.b16 %v999, %v995
          %v1268 = vpack.c.b16 %v1000, %v996
          %v1269 = vpack.c.b16 %v1005, %v1001
          %v1270 = vpack.c.b16 %v1006, %v1002
          %v1271 = vpack.c.b16 %v1007, %v1003
          %v1272 = vpack.c.b16 %v1008, %v1004
          %v1273 = vpack.c.b16 %v1013, %v1009
          %v1274 = vpack.c.b16 %v1014, %v1010
          %v1275 = vpack.c.b16 %v1015, %v1011
          %v1276 = vpack.c.b16 %v1016, %v1012
          %v1277 = vpack.c.b16 %v1021, %v1017
          %v1278 = vpack.c.b16 %v1022, %v1018
          %v1279 = vpack.c.b16 %v1023, %v1019
          %v1280 = vpack.c.b16 %v1024, %v1020
          %v1281 = vpack.c.b16 %v1029, %v1025
          %v1282 = vpack.c.b16 %v1030, %v1026
          %v1283 = vpack.c.b16 %v1031, %v1027
          %v1284 = vpack.c.b16 %v1032, %v1028
          %v1285 = vpack.c.b16 %v1037, %v1033
          %v1286 = vpack.c.b16 %v1038, %v1034
          %v1287 = vpack.c.b16 %v1039, %v1035
          %v1288 = vpack.c.b16 %v1040, %v1036
          %v1289 = vpack.c.b16 %v1045, %v1041
          %v1290 = vpack.c.b16 %v1046, %v1042
          %v1291 = vpack.c.b16 %v1047, %v1043
          %v1292 = vpack.c.b16 %v1048, %v1044
          %v1293 = vpack.c.b16 %v1053, %v1049
          %v1294 = vpack.c.b16 %v1054, %v1050
          %v1295 = vpack.c.b16 %v1055, %v1051
          %v1296 = vpack.c.b16 %v1056, %v1052
          %v1297 = vpack.c.b16 %v1061, %v1057
          %v1298 = vpack.c.b16 %v1062, %v1058
          %v1299 = vpack.c.b16 %v1063, %v1059
          %v1300 = vpack.c.b16 %v1064, %v1060
          %v1301 = vpack.c.b16 %v1069, %v1065
          %v1302 = vpack.c.b16 %v1070, %v1066
          %v1303 = vpack.c.b16 %v1071, %v1067
          %v1304 = vpack.c.b16 %v1072, %v1068
          %v1305 = vpack.c.b16 %v1077, %v1073
          %v1306 = vpack.c.b16 %v1078, %v1074
          %v1307 = vpack.c.b16 %v1079, %v1075
          %v1308 = vpack.c.b16 %v1080, %v1076
          %v1309 = vpack.c.b16 %v1085, %v1081
          %v1310 = vpack.c.b16 %v1086, %v1082
          %v1311 = vpack.c.b16 %v1087, %v1083
          %v1312 = vpack.c.b16 %v1088, %v1084
          %v1313 = vpack.c.b16 %v1093, %v1089
          %v1314 = vpack.c.b16 %v1094, %v1090
          %v1315 = vpack.c.b16 %v1095, %v1091
          %v1316 = vpack.c.b16 %v1096, %v1092
          %v1317 = vpack.c.b16 %v1101, %v1097
          %v1318 = vpack.c.b16 %v1102, %v1098
          %v1319 = vpack.c.b16 %v1103, %v1099
          %v1320 = vpack.c.b16 %v1104, %v1100
          %v1321 = vpack.c.b16 %v1109, %v1105
          %v1322 = vpack.c.b16 %v1110, %v1106
          %v1323 = vpack.c.b16 %v1111, %v1107
          %v1324 = vpack.c.b16 %v1112, %v1108
          %v1325 = vpack.c.b16 %v1117, %v1113
          %v1326 = vpack.c.b16 %v1118, %v1114
          %v1327 = vpack.c.b16 %v1119, %v1115
          %v1328 = vpack.c.b16 %v1120, %v1116
          %v1329 = vpack.c.b16 %v1125, %v1121
          %v1330 = vpack.c.b16 %v1126, %v1122
          %v1331 = vpack.c.b16 %v1127, %v1123
          %v1332 = vpack.c.b16 %v1128, %v1124
          %v1333 = vpack.c.b16 %v1133, %v1129
          %v1334 = vpack.c.b16 %v1134, %v1130
          %v1335 = vpack.c.b16 %v1135, %v1131
          %v1336 = vpack.c.b16 %v1136, %v1132
          %v1337 = vpack.c.b16 %v1141, %v1137
          %v1338 = vpack.c.b16 %v1142, %v1138
          %v1339 = vpack.c.b16 %v1143, %v1139
          %v1340 = vpack.c.b16 %v1144, %v1140
          %vm1537 = vcmask 130048
          %v1539 = vsel %vm1537, %v546, 0
          %1541 = vmatpush.bf16.msra.mxu0 %v1173
          %1542 = vmatpush.bf16.msra.mxu0 %v1169
          %1543 = vmatpush.bf16.msra.mxu0 %v1165
          %1544 = vmatpush.bf16.msra.mxu0 %v1161
          %1545 = vmatpush.bf16.msra.mxu0 %v1157
          %1546 = vmatpush.bf16.msra.mxu0 %v1153
          %1547 = vmatpush.bf16.msra.mxu0 %v1149
          %1548 = vmatpush.bf16.msra.mxu0 %v1145
          %1549 = vmatmul.bf16.gmra.mxu0 %v540
          %v1550 = vpop.f32.mrf.mxu0
          %v1551 = vadd.f32 %v549, %v1550
          %v1552 = vpop.f32.mrf.mxu0
          %v1553 = vadd.f32 %v549, %v1552
          %1554 = vdwg.mxu0
          %1555 = vmatpush.bf16.msra.mxu0 %v1205
          %1556 = vmatpush.bf16.msra.mxu0 %v1201
          %1557 = vmatpush.bf16.msra.mxu0 %v1197
          %1558 = vmatpush.bf16.msra.mxu0 %v1193
          %1559 = vmatpush.bf16.msra.mxu0 %v1189
          %1560 = vmatpush.bf16.msra.mxu0 %v1185
          %1561 = vmatpush.bf16.msra.mxu0 %v1181
          %1562 = vmatpush.bf16.msra.mxu0 %v1177
          %1563 = vmatmul.bf16.gmra.mxu0 %v541
          %v1564 = vpop.f32.mrf.mxu0
          %v1565 = vadd.f32 %v1551, %v1564
          %v1566 = vpop.f32.mrf.mxu0
          %v1567 = vadd.f32 %v1553, %v1566
          %1568 = vdwg.mxu0
          %1569 = vmatpush.bf16.msra.mxu0 %v1237
          %1570 = vmatpush.bf16.msra.mxu0 %v1233
          %1571 = vmatpush.bf16.msra.mxu0 %v1229
          %1572 = vmatpush.bf16.msra.mxu0 %v1225
          %1573 = vmatpush.bf16.msra.mxu0 %v1221
          %1574 = vmatpush.bf16.msra.mxu0 %v1217
          %1575 = vmatpush.bf16.msra.mxu0 %v1213
          %1576 = vmatpush.bf16.msra.mxu0 %v1209
          %1577 = vmatmul.bf16.gmra.mxu0 %v542
          %v1578 = vpop.f32.mrf.mxu0
          %v1579 = vadd.f32 %v1565, %v1578
          %v1580 = vpop.f32.mrf.mxu0
          %v1581 = vadd.f32 %v1567, %v1580
          %1582 = vdwg.mxu0
          %1583 = vmatpush.bf16.msra.mxu0 %v1269
          %1584 = vmatpush.bf16.msra.mxu0 %v1265
          %1585 = vmatpush.bf16.msra.mxu0 %v1261
          %1586 = vmatpush.bf16.msra.mxu0 %v1257
          %1587 = vmatpush.bf16.msra.mxu0 %v1253
          %1588 = vmatpush.bf16.msra.mxu0 %v1249
          %1589 = vmatpush.bf16.msra.mxu0 %v1245
          %1590 = vmatpush.bf16.msra.mxu0 %v1241
          %1591 = vmatmul.bf16.gmra.mxu0 %v543
          %v1592 = vpop.f32.mrf.mxu0
          %v1593 = vadd.f32 %v1579, %v1592
          %v1594 = vpop.f32.mrf.mxu0
          %v1595 = vadd.f32 %v1581, %v1594
          %1596 = vdwg.mxu0
          %1597 = vmatpush.bf16.msra.mxu0 %v1301
          %1598 = vmatpush.bf16.msra.mxu0 %v1297
          %1599 = vmatpush.bf16.msra.mxu0 %v1293
          %1600 = vmatpush.bf16.msra.mxu0 %v1289
          %1601 = vmatpush.bf16.msra.mxu0 %v1285
          %1602 = vmatpush.bf16.msra.mxu0 %v1281
          %1603 = vmatpush.bf16.msra.mxu0 %v1277
          %1604 = vmatpush.bf16.msra.mxu0 %v1273
          %1605 = vmatmul.bf16.gmra.mxu0 %v544
          %v1606 = vpop.f32.mrf.mxu0
          %v1607 = vadd.f32 %v1593, %v1606
          %v1608 = vpop.f32.mrf.mxu0
          %v1609 = vadd.f32 %v1595, %v1608
          %1610 = vdwg.mxu0
          %1611 = vmatpush.bf16.msra.mxu0 %v1333
          %1612 = vmatpush.bf16.msra.mxu0 %v1329
          %1613 = vmatpush.bf16.msra.mxu0 %v1325
          %1614 = vmatpush.bf16.msra.mxu0 %v1321
          %1615 = vmatpush.bf16.msra.mxu0 %v1317
          %1616 = vmatpush.bf16.msra.mxu0 %v1313
          %1617 = vmatpush.bf16.msra.mxu0 %v1309
          %1618 = vmatpush.bf16.msra.mxu0 %v1305
          %1619 = vmatmul.bf16.gmra.mxu0 %v545
          %v1620 = vpop.f32.mrf.mxu0
          %v1621 = vadd.f32 %v1607, %v1620
          %v1622 = vpop.f32.mrf.mxu0
          %v1623 = vadd.f32 %v1609, %v1622
          %1624 = vdwg.mxu0
          %1625 = vmatpush.bf16.msra.mxu0 0
          %1626 = vmatpush.bf16.msra.mxu0 0
          %1627 = vmatpush.bf16.msra.mxu0 0
          %1628 = vmatpush.bf16.msra.mxu0 0
          %1629 = vmatpush.bf16.msra.mxu0 0
          %1630 = vmatpush.bf16.msra.mxu0 0
          %1631 = vmatpush.bf16.msra.mxu0 0
          %1632 = vmatpush.bf16.msra.mxu0 %v1337
          %1633 = vmatmul.bf16.gmra.mxu0 %v1539
          %v1634 = vpop.f32.mrf.mxu0
          %v1635 = vadd.f32 %v1621, %v1634
          %v1636 = vpop.f32.mrf.mxu0
          %v1637 = vadd.f32 %v1623, %v1636
          %1638 = vdwg.mxu0
          %1639 = vmatpush.bf16.msra.mxu0 %v1174
          %1640 = vmatpush.bf16.msra.mxu0 %v1170
          %1641 = vmatpush.bf16.msra.mxu0 %v1166
          %1642 = vmatpush.bf16.msra.mxu0 %v1162
          %1643 = vmatpush.bf16.msra.mxu0 %v1158
          %1644 = vmatpush.bf16.msra.mxu0 %v1154
          %1645 = vmatpush.bf16.msra.mxu0 %v1150
          %1646 = vmatpush.bf16.msra.mxu0 %v1146
          %1647 = vmatmul.bf16.gmra.mxu0 %v540
          %v1648 = vpop.f32.mrf.mxu0
          %v1649 = vadd.f32 %v550, %v1648
          %v1650 = vpop.f32.mrf.mxu0
          %v1651 = vadd.f32 %v550, %v1650
          %1652 = vdwg.mxu0
          %1653 = vmatpush.bf16.msra.mxu0 %v1206
          %1654 = vmatpush.bf16.msra.mxu0 %v1202
          %1655 = vmatpush.bf16.msra.mxu0 %v1198
          %1656 = vmatpush.bf16.msra.mxu0 %v1194
          %1657 = vmatpush.bf16.msra.mxu0 %v1190
          %1658 = vmatpush.bf16.msra.mxu0 %v1186
          %1659 = vmatpush.bf16.msra.mxu0 %v1182
          %1660 = vmatpush.bf16.msra.mxu0 %v1178
          %1661 = vmatmul.bf16.gmra.mxu0 %v541
          %v1662 = vpop.f32.mrf.mxu0
          %v1663 = vadd.f32 %v1649, %v1662
          %v1664 = vpop.f32.mrf.mxu0
          %v1665 = vadd.f32 %v1651, %v1664
          %1666 = vdwg.mxu0
          %1667 = vmatpush.bf16.msra.mxu0 %v1238
          %1668 = vmatpush.bf16.msra.mxu0 %v1234
          %1669 = vmatpush.bf16.msra.mxu0 %v1230
          %1670 = vmatpush.bf16.msra.mxu0 %v1226
          %1671 = vmatpush.bf16.msra.mxu0 %v1222
          %1672 = vmatpush.bf16.msra.mxu0 %v1218
          %1673 = vmatpush.bf16.msra.mxu0 %v1214
          %1674 = vmatpush.bf16.msra.mxu0 %v1210
          %1675 = vmatmul.bf16.gmra.mxu0 %v542
          %v1676 = vpop.f32.mrf.mxu0
          %v1677 = vadd.f32 %v1663, %v1676
          %v1678 = vpop.f32.mrf.mxu0
          %v1679 = vadd.f32 %v1665, %v1678
          %1680 = vdwg.mxu0
          %1681 = vmatpush.bf16.msra.mxu0 %v1270
          %1682 = vmatpush.bf16.msra.mxu0 %v1266
          %1683 = vmatpush.bf16.msra.mxu0 %v1262
          %1684 = vmatpush.bf16.msra.mxu0 %v1258
          %1685 = vmatpush.bf16.msra.mxu0 %v1254
          %1686 = vmatpush.bf16.msra.mxu0 %v1250
          %1687 = vmatpush.bf16.msra.mxu0 %v1246
          %1688 = vmatpush.bf16.msra.mxu0 %v1242
          %1689 = vmatmul.bf16.gmra.mxu0 %v543
          %v1690 = vpop.f32.mrf.mxu0
          %v1691 = vadd.f32 %v1677, %v1690
          %v1692 = vpop.f32.mrf.mxu0
          %v1693 = vadd.f32 %v1679, %v1692
          %1694 = vdwg.mxu0
          %1695 = vmatpush.bf16.msra.mxu0 %v1302
          %1696 = vmatpush.bf16.msra.mxu0 %v1298
          %1697 = vmatpush.bf16.msra.mxu0 %v1294
          %1698 = vmatpush.bf16.msra.mxu0 %v1290
          %1699 = vmatpush.bf16.msra.mxu0 %v1286
          %1700 = vmatpush.bf16.msra.mxu0 %v1282
          %1701 = vmatpush.bf16.msra.mxu0 %v1278
          %1702 = vmatpush.bf16.msra.mxu0 %v1274
          %1703 = vmatmul.bf16.gmra.mxu0 %v544
          %v1704 = vpop.f32.mrf.mxu0
          %v1705 = vadd.f32 %v1691, %v1704
          %v1706 = vpop.f32.mrf.mxu0
          %v1707 = vadd.f32 %v1693, %v1706
          %1708 = vdwg.mxu0
          %1709 = vmatpush.bf16.msra.mxu0 %v1334
          %1710 = vmatpush.bf16.msra.mxu0 %v1330
          %1711 = vmatpush.bf16.msra.mxu0 %v1326
          %1712 = vmatpush.bf16.msra.mxu0 %v1322
          %1713 = vmatpush.bf16.msra.mxu0 %v1318
          %1714 = vmatpush.bf16.msra.mxu0 %v1314
          %1715 = vmatpush.bf16.msra.mxu0 %v1310
          %1716 = vmatpush.bf16.msra.mxu0 %v1306
          %1717 = vmatmul.bf16.gmra.mxu0 %v545
          %v1718 = vpop.f32.mrf.mxu0
          %v1719 = vadd.f32 %v1705, %v1718
          %v1720 = vpop.f32.mrf.mxu0
          %v1721 = vadd.f32 %v1707, %v1720
          %1722 = vdwg.mxu0
          %1723 = vmatpush.bf16.msra.mxu0 0
          %1724 = vmatpush.bf16.msra.mxu0 0
          %1725 = vmatpush.bf16.msra.mxu0 0
          %1726 = vmatpush.bf16.msra.mxu0 0
          %1727 = vmatpush.bf16.msra.mxu0 0
          %1728 = vmatpush.bf16.msra.mxu0 0
          %1729 = vmatpush.bf16.msra.mxu0 0
          %1730 = vmatpush.bf16.msra.mxu0 %v1338
          %1731 = vmatmul.bf16.gmra.mxu0 %v1539
          %v1732 = vpop.f32.mrf.mxu0
          %v1733 = vadd.f32 %v1719, %v1732
          %v1734 = vpop.f32.mrf.mxu0
          %v1735 = vadd.f32 %v1721, %v1734
          %1736 = vdwg.mxu0
          %1737 = vmatpush.bf16.msra.mxu0 %v1175
          %1738 = vmatpush.bf16.msra.mxu0 %v1171
          %1739 = vmatpush.bf16.msra.mxu0 %v1167
          %1740 = vmatpush.bf16.msra.mxu0 %v1163
          %1741 = vmatpush.bf16.msra.mxu0 %v1159
          %1742 = vmatpush.bf16.msra.mxu0 %v1155
          %1743 = vmatpush.bf16.msra.mxu0 %v1151
          %1744 = vmatpush.bf16.msra.mxu0 %v1147
          %1745 = vmatmul.bf16.gmra.mxu0 %v540
          %v1746 = vpop.f32.mrf.mxu0
          %v1747 = vadd.f32 %v551, %v1746
          %v1748 = vpop.f32.mrf.mxu0
          %v1749 = vadd.f32 %v551, %v1748
          %1750 = vdwg.mxu0
          %1751 = vmatpush.bf16.msra.mxu0 %v1207
          %1752 = vmatpush.bf16.msra.mxu0 %v1203
          %1753 = vmatpush.bf16.msra.mxu0 %v1199
          %1754 = vmatpush.bf16.msra.mxu0 %v1195
          %1755 = vmatpush.bf16.msra.mxu0 %v1191
          %1756 = vmatpush.bf16.msra.mxu0 %v1187
          %1757 = vmatpush.bf16.msra.mxu0 %v1183
          %1758 = vmatpush.bf16.msra.mxu0 %v1179
          %1759 = vmatmul.bf16.gmra.mxu0 %v541
          %v1760 = vpop.f32.mrf.mxu0
          %v1761 = vadd.f32 %v1747, %v1760
          %v1762 = vpop.f32.mrf.mxu0
          %v1763 = vadd.f32 %v1749, %v1762
          %1764 = vdwg.mxu0
          %1765 = vmatpush.bf16.msra.mxu0 %v1239
          %1766 = vmatpush.bf16.msra.mxu0 %v1235
          %1767 = vmatpush.bf16.msra.mxu0 %v1231
          %1768 = vmatpush.bf16.msra.mxu0 %v1227
          %1769 = vmatpush.bf16.msra.mxu0 %v1223
          %1770 = vmatpush.bf16.msra.mxu0 %v1219
          %1771 = vmatpush.bf16.msra.mxu0 %v1215
          %1772 = vmatpush.bf16.msra.mxu0 %v1211
          %1773 = vmatmul.bf16.gmra.mxu0 %v542
          %v1774 = vpop.f32.mrf.mxu0
          %v1775 = vadd.f32 %v1761, %v1774
          %v1776 = vpop.f32.mrf.mxu0
          %v1777 = vadd.f32 %v1763, %v1776
          %1778 = vdwg.mxu0
          %1779 = vmatpush.bf16.msra.mxu0 %v1271
          %1780 = vmatpush.bf16.msra.mxu0 %v1267
          %1781 = vmatpush.bf16.msra.mxu0 %v1263
          %1782 = vmatpush.bf16.msra.mxu0 %v1259
          %1783 = vmatpush.bf16.msra.mxu0 %v1255
          %1784 = vmatpush.bf16.msra.mxu0 %v1251
          %1785 = vmatpush.bf16.msra.mxu0 %v1247
          %1786 = vmatpush.bf16.msra.mxu0 %v1243
          %1787 = vmatmul.bf16.gmra.mxu0 %v543
          %v1788 = vpop.f32.mrf.mxu0
          %v1789 = vadd.f32 %v1775, %v1788
          %v1790 = vpop.f32.mrf.mxu0
          %v1791 = vadd.f32 %v1777, %v1790
          %1792 = vdwg.mxu0
          %1793 = vmatpush.bf16.msra.mxu0 %v1303
          %1794 = vmatpush.bf16.msra.mxu0 %v1299
          %1795 = vmatpush.bf16.msra.mxu0 %v1295
          %1796 = vmatpush.bf16.msra.mxu0 %v1291
          %1797 = vmatpush.bf16.msra.mxu0 %v1287
          %1798 = vmatpush.bf16.msra.mxu0 %v1283
          %1799 = vmatpush.bf16.msra.mxu0 %v1279
          %1800 = vmatpush.bf16.msra.mxu0 %v1275
          %1801 = vmatmul.bf16.gmra.mxu0 %v544
          %v1802 = vpop.f32.mrf.mxu0
          %v1803 = vadd.f32 %v1789, %v1802
          %v1804 = vpop.f32.mrf.mxu0
          %v1805 = vadd.f32 %v1791, %v1804
          %1806 = vdwg.mxu0
          %1807 = vmatpush.bf16.msra.mxu0 %v1335
          %1808 = vmatpush.bf16.msra.mxu0 %v1331
          %1809 = vmatpush.bf16.msra.mxu0 %v1327
          %1810 = vmatpush.bf16.msra.mxu0 %v1323
          %1811 = vmatpush.bf16.msra.mxu0 %v1319
          %1812 = vmatpush.bf16.msra.mxu0 %v1315
          %1813 = vmatpush.bf16.msra.mxu0 %v1311
          %1814 = vmatpush.bf16.msra.mxu0 %v1307
          %1815 = vmatmul.bf16.gmra.mxu0 %v545
          %v1816 = vpop.f32.mrf.mxu0
          %v1817 = vadd.f32 %v1803, %v1816
          %v1818 = vpop.f32.mrf.mxu0
          %v1819 = vadd.f32 %v1805, %v1818
          %1820 = vdwg.mxu0
          %1821 = vmatpush.bf16.msra.mxu0 0
          %1822 = vmatpush.bf16.msra.mxu0 0
          %1823 = vmatpush.bf16.msra.mxu0 0
          %1824 = vmatpush.bf16.msra.mxu0 0
          %1825 = vmatpush.bf16.msra.mxu0 0
          %1826 = vmatpush.bf16.msra.mxu0 0
          %1827 = vmatpush.bf16.msra.mxu0 0
          %1828 = vmatpush.bf16.msra.mxu0 %v1339
          %1829 = vmatmul.bf16.gmra.mxu0 %v1539
          %v1830 = vpop.f32.mrf.mxu0
          %v1831 = vadd.f32 %v1817, %v1830
          %v1832 = vpop.f32.mrf.mxu0
          %v1833 = vadd.f32 %v1819, %v1832
          %1834 = vdwg.mxu0
          %1835 = vmatpush.bf16.msra.mxu0 %v1176
          %1836 = vmatpush.bf16.msra.mxu0 %v1172
          %1837 = vmatpush.bf16.msra.mxu0 %v1168
          %1838 = vmatpush.bf16.msra.mxu0 %v1164
          %1839 = vmatpush.bf16.msra.mxu0 %v1160
          %1840 = vmatpush.bf16.msra.mxu0 %v1156
          %1841 = vmatpush.bf16.msra.mxu0 %v1152
          %1842 = vmatpush.bf16.msra.mxu0 %v1148
          %1843 = vmatmul.bf16.gmra.mxu0 %v540
          %v1844 = vpop.f32.mrf.mxu0
          %v1845 = vadd.f32 %v552, %v1844
          %v1846 = vpop.f32.mrf.mxu0
          %v1847 = vadd.f32 %v552, %v1846
          %1848 = vdwg.mxu0
          %1849 = vmatpush.bf16.msra.mxu0 %v1208
          %1850 = vmatpush.bf16.msra.mxu0 %v1204
          %1851 = vmatpush.bf16.msra.mxu0 %v1200
          %1852 = vmatpush.bf16.msra.mxu0 %v1196
          %1853 = vmatpush.bf16.msra.mxu0 %v1192
          %1854 = vmatpush.bf16.msra.mxu0 %v1188
          %1855 = vmatpush.bf16.msra.mxu0 %v1184
          %1856 = vmatpush.bf16.msra.mxu0 %v1180
          %1857 = vmatmul.bf16.gmra.mxu0 %v541
          %v1858 = vpop.f32.mrf.mxu0
          %v1859 = vadd.f32 %v1845, %v1858
          %v1860 = vpop.f32.mrf.mxu0
          %v1861 = vadd.f32 %v1847, %v1860
          %1862 = vdwg.mxu0
          %1863 = vmatpush.bf16.msra.mxu0 %v1240
          %1864 = vmatpush.bf16.msra.mxu0 %v1236
          %1865 = vmatpush.bf16.msra.mxu0 %v1232
          %1866 = vmatpush.bf16.msra.mxu0 %v1228
          %1867 = vmatpush.bf16.msra.mxu0 %v1224
          %1868 = vmatpush.bf16.msra.mxu0 %v1220
          %1869 = vmatpush.bf16.msra.mxu0 %v1216
          %1870 = vmatpush.bf16.msra.mxu0 %v1212
          %1871 = vmatmul.bf16.gmra.mxu0 %v542
          %v1872 = vpop.f32.mrf.mxu0
          %v1873 = vadd.f32 %v1859, %v1872
          %v1874 = vpop.f32.mrf.mxu0
          %v1875 = vadd.f32 %v1861, %v1874
          %1876 = vdwg.mxu0
          %1877 = vmatpush.bf16.msra.mxu0 %v1272
          %1878 = vmatpush.bf16.msra.mxu0 %v1268
          %1879 = vmatpush.bf16.msra.mxu0 %v1264
          %1880 = vmatpush.bf16.msra.mxu0 %v1260
          %1881 = vmatpush.bf16.msra.mxu0 %v1256
          %1882 = vmatpush.bf16.msra.mxu0 %v1252
          %1883 = vmatpush.bf16.msra.mxu0 %v1248
          %1884 = vmatpush.bf16.msra.mxu0 %v1244
          %1885 = vmatmul.bf16.gmra.mxu0 %v543
          %v1886 = vpop.f32.mrf.mxu0
          %v1887 = vadd.f32 %v1873, %v1886
          %v1888 = vpop.f32.mrf.mxu0
          %v1889 = vadd.f32 %v1875, %v1888
          %1890 = vdwg.mxu0
          %1891 = vmatpush.bf16.msra.mxu0 %v1304
          %1892 = vmatpush.bf16.msra.mxu0 %v1300
          %1893 = vmatpush.bf16.msra.mxu0 %v1296
          %1894 = vmatpush.bf16.msra.mxu0 %v1292
          %1895 = vmatpush.bf16.msra.mxu0 %v1288
          %1896 = vmatpush.bf16.msra.mxu0 %v1284
          %1897 = vmatpush.bf16.msra.mxu0 %v1280
          %1898 = vmatpush.bf16.msra.mxu0 %v1276
          %1899 = vmatmul.bf16.gmra.mxu0 %v544
          %v1900 = vpop.f32.mrf.mxu0
          %v1901 = vadd.f32 %v1887, %v1900
          %v1902 = vpop.f32.mrf.mxu0
          %v1903 = vadd.f32 %v1889, %v1902
          %1904 = vdwg.mxu0
          %1905 = vmatpush.bf16.msra.mxu0 %v1336
          %1906 = vmatpush.bf16.msra.mxu0 %v1332
          %1907 = vmatpush.bf16.msra.mxu0 %v1328
          %1908 = vmatpush.bf16.msra.mxu0 %v1324
          %1909 = vmatpush.bf16.msra.mxu0 %v1320
          %1910 = vmatpush.bf16.msra.mxu0 %v1316
          %1911 = vmatpush.bf16.msra.mxu0 %v1312
          %1912 = vmatpush.bf16.msra.mxu0 %v1308
          %1913 = vmatmul.bf16.gmra.mxu0 %v545
          %v1914 = vpop.f32.mrf.mxu0
          %v1915 = vadd.f32 %v1901, %v1914
          %v1916 = vpop.f32.mrf.mxu0
          %v1917 = vadd.f32 %v1903, %v1916
          %1918 = vdwg.mxu0
          %1919 = vmatpush.bf16.msra.mxu0 0
          %1920 = vmatpush.bf16.msra.mxu0 0
          %1921 = vmatpush.bf16.msra.mxu0 0
          %1922 = vmatpush.bf16.msra.mxu0 0
          %1923 = vmatpush.bf16.msra.mxu0 0
          %1924 = vmatpush.bf16.msra.mxu0 0
          %1925 = vmatpush.bf16.msra.mxu0 0
          %1926 = vmatpush.bf16.msra.mxu0 %v1340
          %1927 = vmatmul.bf16.gmra.mxu0 %v1539
          %v1928 = vpop.f32.mrf.mxu0
          %v1929 = vadd.f32 %v1915, %v1928
          %v1930 = vpop.f32.mrf.mxu0
          %v1931 = vadd.f32 %v1917, %v1930
          %1932 = vdwg.mxu0
          %v1933 = vld [vmem:[#allocation8 + $0x2] sm:$0x3]
          %v1935 = vperm.slane %v1933, 0
          %v1936 = vperm.slane %v1933, 1
          %v1947 = vunpack.c.l.b16 %v276
          %v1948 = vunpack.c.h.b16 %v276
          %v1949 = vunpack.c.l.b16 %v277
          %v1950 = vunpack.c.h.b16 %v277
          %v1951 = vunpack.c.l.b16 %v278
          %v1952 = vunpack.c.h.b16 %v278
          %v1953 = vunpack.c.l.b16 %v279
          %v1954 = vunpack.c.l.b16 %v280
          %v1955 = vunpack.c.h.b16 %v280
          %v1956 = vunpack.c.l.b16 %v281
          %v1957 = vunpack.c.h.b16 %v281
          %v1958 = vunpack.c.l.b16 %v282
          %v1959 = vunpack.c.h.b16 %v282
          %v1960 = vunpack.c.l.b16 %v283
          %v1961 = vpack.c.b16 %v1954, %v1947
          %v1962 = vpack.c.b16 %v1955, %v1948
          %v1963 = vpack.c.b16 %v1956, %v1949
          %v1964 = vpack.c.b16 %v1957, %v1950
          %v1965 = vpack.c.b16 %v1958, %v1951
          %v1966 = vpack.c.b16 %v1959, %v1952
          %v1967 = vpack.c.b16 %v1960, %v1953
          %v1975 = vsel %vm1537, %v1967, 0
          %1977 = vmatpush.bf16.msra.mxu0 %v1175
          %1978 = vmatpush.bf16.msra.mxu0 %v1171
          %1979 = vmatpush.bf16.msra.mxu0 %v1167
          %1980 = vmatpush.bf16.msra.mxu0 %v1163
          %1981 = vmatpush.bf16.msra.mxu0 %v1159
          %1982 = vmatpush.bf16.msra.mxu0 %v1155
          %1983 = vmatpush.bf16.msra.mxu0 %v1151
          %1984 = vmatpush.bf16.msra.mxu0 %v1147
          %1985 = vmatmul.bf16.gmra.mxu0 %v1961
          %v1986 = vpop.f32.mrf.mxu0
          %v1987 = vadd.f32 %v1935, %v1986
          %v1988 = vpop.f32.mrf.mxu0
          %v1989 = vadd.f32 %v1935, %v1988
          %1990 = vdwg.mxu0
          %1991 = vmatpush.bf16.msra.mxu0 %v1207
          %1992 = vmatpush.bf16.msra.mxu0 %v1203
          %1993 = vmatpush.bf16.msra.mxu0 %v1199
          %1994 = vmatpush.bf16.msra.mxu0 %v1195
          %1995 = vmatpush.bf16.msra.mxu0 %v1191
          %1996 = vmatpush.bf16.msra.mxu0 %v1187
          %1997 = vmatpush.bf16.msra.mxu0 %v1183
          %1998 = vmatpush.bf16.msra.mxu0 %v1179
          %1999 = vmatmul.bf16.gmra.mxu0 %v1962
          %v2000 = vpop.f32.mrf.mxu0
          %v2001 = vadd.f32 %v1987, %v2000
          %v2002 = vpop.f32.mrf.mxu0
          %v2003 = vadd.f32 %v1989, %v2002
          %2004 = vdwg.mxu0
          %2005 = vmatpush.bf16.msra.mxu0 %v1239
          %2006 = vmatpush.bf16.msra.mxu0 %v1235
          %2007 = vmatpush.bf16.msra.mxu0 %v1231
          %2008 = vmatpush.bf16.msra.mxu0 %v1227
          %2009 = vmatpush.bf16.msra.mxu0 %v1223
          %2010 = vmatpush.bf16.msra.mxu0 %v1219
          %2011 = vmatpush.bf16.msra.mxu0 %v1215
          %2012 = vmatpush.bf16.msra.mxu0 %v1211
          %2013 = vmatmul.bf16.gmra.mxu0 %v1963
          %v2014 = vpop.f32.mrf.mxu0
          %v2015 = vadd.f32 %v2001, %v2014
          %v2016 = vpop.f32.mrf.mxu0
          %v2017 = vadd.f32 %v2003, %v2016
          %2018 = vdwg.mxu0
          %2019 = vmatpush.bf16.msra.mxu0 %v1271
          %2020 = vmatpush.bf16.msra.mxu0 %v1267
          %2021 = vmatpush.bf16.msra.mxu0 %v1263
          %2022 = vmatpush.bf16.msra.mxu0 %v1259
          %2023 = vmatpush.bf16.msra.mxu0 %v1255
          %2024 = vmatpush.bf16.msra.mxu0 %v1251
          %2025 = vmatpush.bf16.msra.mxu0 %v1247
          %2026 = vmatpush.bf16.msra.mxu0 %v1243
          %2027 = vmatmul.bf16.gmra.mxu0 %v1964
          %v2028 = vpop.f32.mrf.mxu0
          %v2029 = vadd.f32 %v2015, %v2028
          %v2030 = vpop.f32.mrf.mxu0
          %v2031 = vadd.f32 %v2017, %v2030
          %2032 = vdwg.mxu0
          %2033 = vmatpush.bf16.msra.mxu0 %v1303
          %2034 = vmatpush.bf16.msra.mxu0 %v1299
          %2035 = vmatpush.bf16.msra.mxu0 %v1295
          %2036 = vmatpush.bf16.msra.mxu0 %v1291
          %2037 = vmatpush.bf16.msra.mxu0 %v1287
          %2038 = vmatpush.bf16.msra.mxu0 %v1283
          %2039 = vmatpush.bf16.msra.mxu0 %v1279
          %2040 = vmatpush.bf16.msra.mxu0 %v1275
          %2041 = vmatmul.bf16.gmra.mxu0 %v1965
          %v2042 = vpop.f32.mrf.mxu0
          %v2043 = vadd.f32 %v2029, %v2042
          %v2044 = vpop.f32.mrf.mxu0
          %v2045 = vadd.f32 %v2031, %v2044
          %2046 = vdwg.mxu0
          %2047 = vmatpush.bf16.msra.mxu0 %v1335
          %2048 = vmatpush.bf16.msra.mxu0 %v1331
          %2049 = vmatpush.bf16.msra.mxu0 %v1327
          %2050 = vmatpush.bf16.msra.mxu0 %v1323
          %2051 = vmatpush.bf16.msra.mxu0 %v1319
          %2052 = vmatpush.bf16.msra.mxu0 %v1315
          %2053 = vmatpush.bf16.msra.mxu0 %v1311
          %2054 = vmatpush.bf16.msra.mxu0 %v1307
          %2055 = vmatmul.bf16.gmra.mxu0 %v1966
          %v2056 = vpop.f32.mrf.mxu0
          %v2057 = vadd.f32 %v2043, %v2056
          %v2058 = vpop.f32.mrf.mxu0
          %v2059 = vadd.f32 %v2045, %v2058
          %2060 = vdwg.mxu0
          %2061 = vmatpush.bf16.msra.mxu0 0
          %2062 = vmatpush.bf16.msra.mxu0 0
          %2063 = vmatpush.bf16.msra.mxu0 0
          %2064 = vmatpush.bf16.msra.mxu0 0
          %2065 = vmatpush.bf16.msra.mxu0 0
          %2066 = vmatpush.bf16.msra.mxu0 0
          %2067 = vmatpush.bf16.msra.mxu0 0
          %2068 = vmatpush.bf16.msra.mxu0 %v1339
          %2069 = vmatmul.bf16.gmra.mxu0 %v1975
          %v2070 = vpop.f32.mrf.mxu0
          %v2071 = vadd.f32 %v2057, %v2070
          %v2072 = vpop.f32.mrf.mxu0
          %v2073 = vadd.f32 %v2059, %v2072
          %2074 = vdwg.mxu0
          %2075 = vmatpush.bf16.msra.mxu0 %v1176
          %2076 = vmatpush.bf16.msra.mxu0 %v1172
          %2077 = vmatpush.bf16.msra.mxu0 %v1168
          %2078 = vmatpush.bf16.msra.mxu0 %v1164
          %2079 = vmatpush.bf16.msra.mxu0 %v1160
          %2080 = vmatpush.bf16.msra.mxu0 %v1156
          %2081 = vmatpush.bf16.msra.mxu0 %v1152
          %2082 = vmatpush.bf16.msra.mxu0 %v1148
          %2083 = vmatmul.bf16.gmra.mxu0 %v1961
          %v2084 = vpop.f32.mrf.mxu0
          %v2085 = vadd.f32 %v1936, %v2084
          %v2086 = vpop.f32.mrf.mxu0
          %v2087 = vadd.f32 %v1936, %v2086
          %2088 = vdwg.mxu0
          %2089 = vmatpush.bf16.msra.mxu0 %v1208
          %2090 = vmatpush.bf16.msra.mxu0 %v1204
          %2091 = vmatpush.bf16.msra.mxu0 %v1200
          %2092 = vmatpush.bf16.msra.mxu0 %v1196
          %2093 = vmatpush.bf16.msra.mxu0 %v1192
          %2094 = vmatpush.bf16.msra.mxu0 %v1188
          %2095 = vmatpush.bf16.msra.mxu0 %v1184
          %2096 = vmatpush.bf16.msra.mxu0 %v1180
          %2097 = vmatmul.bf16.gmra.mxu0 %v1962
          %v2098 = vpop.f32.mrf.mxu0
          %v2099 = vadd.f32 %v2085, %v2098
          %v2100 = vpop.f32.mrf.mxu0
          %v2101 = vadd.f32 %v2087, %v2100
          %2102 = vdwg.mxu0
          %2103 = vmatpush.bf16.msra.mxu0 %v1240
          %2104 = vmatpush.bf16.msra.mxu0 %v1236
          %2105 = vmatpush.bf16.msra.mxu0 %v1232
          %2106 = vmatpush.bf16.msra.mxu0 %v1228
          %2107 = vmatpush.bf16.msra.mxu0 %v1224
          %2108 = vmatpush.bf16.msra.mxu0 %v1220
          %2109 = vmatpush.bf16.msra.mxu0 %v1216
          %2110 = vmatpush.bf16.msra.mxu0 %v1212
          %2111 = vmatmul.bf16.gmra.mxu0 %v1963
          %v2112 = vpop.f32.mrf.mxu0
          %v2113 = vadd.f32 %v2099, %v2112
          %v2114 = vpop.f32.mrf.mxu0
          %v2115 = vadd.f32 %v2101, %v2114
          %2116 = vdwg.mxu0
          %2117 = vmatpush.bf16.msra.mxu0 %v1272
          %2118 = vmatpush.bf16.msra.mxu0 %v1268
          %2119 = vmatpush.bf16.msra.mxu0 %v1264
          %2120 = vmatpush.bf16.msra.mxu0 %v1260
          %2121 = vmatpush.bf16.msra.mxu0 %v1256
          %2122 = vmatpush.bf16.msra.mxu0 %v1252
          %2123 = vmatpush.bf16.msra.mxu0 %v1248
          %2124 = vmatpush.bf16.msra.mxu0 %v1244
          %2125 = vmatmul.bf16.gmra.mxu0 %v1964
          %v2126 = vpop.f32.mrf.mxu0
          %v2127 = vadd.f32 %v2113, %v2126
          %v2128 = vpop.f32.mrf.mxu0
          %v2129 = vadd.f32 %v2115, %v2128
          %2130 = vdwg.mxu0
          %2131 = vmatpush.bf16.msra.mxu0 %v1304
          %2132 = vmatpush.bf16.msra.mxu0 %v1300
          %2133 = vmatpush.bf16.msra.mxu0 %v1296
          %2134 = vmatpush.bf16.msra.mxu0 %v1292
          %2135 = vmatpush.bf16.msra.mxu0 %v1288
          %2136 = vmatpush.bf16.msra.mxu0 %v1284
          %2137 = vmatpush.bf16.msra.mxu0 %v1280
          %2138 = vmatpush.bf16.msra.mxu0 %v1276
          %2139 = vmatmul.bf16.gmra.mxu0 %v1965
          %v2140 = vpop.f32.mrf.mxu0
          %v2141 = vadd.f32 %v2127, %v2140
          %v2142 = vpop.f32.mrf.mxu0
          %v2143 = vadd.f32 %v2129, %v2142
          %2144 = vdwg.mxu0
          %2145 = vmatpush.bf16.msra.mxu0 %v1336
          %2146 = vmatpush.bf16.msra.mxu0 %v1332
          %2147 = vmatpush.bf16.msra.mxu0 %v1328
          %2148 = vmatpush.bf16.msra.mxu0 %v1324
          %2149 = vmatpush.bf16.msra.mxu0 %v1320
          %2150 = vmatpush.bf16.msra.mxu0 %v1316
          %2151 = vmatpush.bf16.msra.mxu0 %v1312
          %2152 = vmatpush.bf16.msra.mxu0 %v1308
          %2153 = vmatmul.bf16.gmra.mxu0 %v1966
          %v2154 = vpop.f32.mrf.mxu0
          %v2155 = vadd.f32 %v2141, %v2154
          %v2156 = vpop.f32.mrf.mxu0
          %v2157 = vadd.f32 %v2143, %v2156
          %2158 = vdwg.mxu0
          %2159 = vmatpush.bf16.msra.mxu0 0
          %2160 = vmatpush.bf16.msra.mxu0 0
          %2161 = vmatpush.bf16.msra.mxu0 0
          %2162 = vmatpush.bf16.msra.mxu0 0
          %2163 = vmatpush.bf16.msra.mxu0 0
          %2164 = vmatpush.bf16.msra.mxu0 0
          %2165 = vmatpush.bf16.msra.mxu0 0
          %2166 = vmatpush.bf16.msra.mxu0 %v1340
          %2167 = vmatmul.bf16.gmra.mxu0 %v1975
          %v2168 = vpop.f32.mrf.mxu0
          %v2169 = vadd.f32 %v2155, %v2168
          %v2170 = vpop.f32.mrf.mxu0
          %v2171 = vadd.f32 %v2157, %v2170
          %2172 = vdwg.mxu0
          %v2173 = vmul.f32 %v1635, %v1831
          %v2174 = vmul.f32 %v1733, %v1929
          %v2175 = vmul.f32 %v1637, %v1833
          %v2176 = vmul.f32 %v1735, %v1931
          %v2177 = vadd.f32 %v2173, %v2174
          %2178 = vadd.xlane.f32.xlu0 %v2177
          %v2179 = vpop.xlane.xlu0 %2178
          %v2180 = vadd.f32 %v2175, %v2176
          %2181 = vadd.xlane.f32.xlu0 %v2180
          %v2182 = vpop.xlane.xlu0 %2181
          %v2183 = vmul.f32 %v2179, 0.0625
          %v2184 = vmul.f32 %v2182, 0.0625
          %v2185 = vmul.f32 %v1635, %v2071
          %v2186 = vmul.f32 %v1733, %v2169
          %v2187 = vmul.f32 %v1637, %v2073
          %v2188 = vmul.f32 %v1735, %v2171
          %v2189 = vadd.f32 %v2185, %v2186
          %2190 = vadd.xlane.f32.xlu0 %v2189
          %v2191 = vpop.xlane.xlu0 %2190
          %v2192 = vadd.f32 %v2187, %v2188
          %2193 = vadd.xlane.f32.xlu0 %v2192
          %v2194 = vpop.xlane.xlu0 %2193
          %v2195 = vmul.f32 %v2191, 0.0625
          %v2196 = vmul.f32 %v2194, 0.0625
          %v2197 = vmax.f32 %v2183, %v2195
          %v2198 = vmax.f32 %v2184, %v2196
          %v2199 = vsub.f32 %v2183, %v2197
          %v2200 = vsub.f32 %v2184, %v2198
          %v2201 = vmul.f32 %v2199, 1.442695
          %v2202 = vpow.pop %v2201
          %v2203 = vmul.f32 %v2200, 1.442695
          %v2204 = vpow.pop %v2203
          %v2205 = vsub.f32 %v2195, %v2197
          %v2206 = vsub.f32 %v2196, %v2198
          %v2207 = vmul.f32 %v2205, 1.442695
          %v2208 = vpow.pop %v2207
          %v2209 = vmul.f32 %v2206, 1.442695
          %v2210 = vpow.pop %v2209
          %v2211 = vadd.f32 %v2202, %v2208
          %v2212 = vadd.f32 %v2204, %v2210
          %v2213 = vrcp.pop %v2211
          %v2214 = vrcp.pop %v2212
          %v2215 = vmul.f32 %v2202, %v330
          %v2216 = vmul.f32 %v2202, %v331
          %v2217 = vmul.f32 %v2202, %v332
          %v2218 = vmul.f32 %v2202, %v333
          %v2219 = vmul.f32 %v2202, %v334
          %v2220 = vmul.f32 %v2202, %v335
          %v2221 = vmul.f32 %v2202, %v336
          %v2222 = vmul.f32 %v2204, %v337
          %v2223 = vmul.f32 %v2204, %v338
          %v2224 = vmul.f32 %v2204, %v339
          %v2225 = vmul.f32 %v2204, %v340
          %v2226 = vmul.f32 %v2204, %v341
          %v2227 = vmul.f32 %v2204, %v342
          %v2228 = vmul.f32 %v2204, %v343
          %v2229 = vunpack.c.l.bf16 %v276
          %v2230 = vunpack.c.h.bf16 %v276
          %v2231 = vunpack.c.l.bf16 %v277
          %v2232 = vunpack.c.h.bf16 %v277
          %v2233 = vunpack.c.l.bf16 %v278
          %v2234 = vunpack.c.h.bf16 %v278
          %v2235 = vunpack.c.l.bf16 %v279
          %v2236 = vunpack.c.l.bf16 %v280
          %v2237 = vunpack.c.h.bf16 %v280
          %v2238 = vunpack.c.l.bf16 %v281
          %v2239 = vunpack.c.h.bf16 %v281
          %v2240 = vunpack.c.l.bf16 %v282
          %v2241 = vunpack.c.h.bf16 %v282
          %v2242 = vunpack.c.l.bf16 %v283
          %v2243 = vmul.f32 %v2208, %v2229
          %v2244 = vmul.f32 %v2208, %v2230
          %v2245 = vmul.f32 %v2208, %v2231
          %v2246 = vmul.f32 %v2208, %v2232
          %v2247 = vmul.f32 %v2208, %v2233
          %v2248 = vmul.f32 %v2208, %v2234
          %v2249 = vmul.f32 %v2208, %v2235
          %v2250 = vmul.f32 %v2210, %v2236
          %v2251 = vmul.f32 %v2210, %v2237
          %v2252 = vmul.f32 %v2210, %v2238
          %v2253 = vmul.f32 %v2210, %v2239
          %v2254 = vmul.f32 %v2210, %v2240
          %v2255 = vmul.f32 %v2210, %v2241
          %v2256 = vmul.f32 %v2210, %v2242
          %v2257 = vadd.f32 %v2215, %v2243
          %v2258 = vadd.f32 %v2216, %v2244
          %v2259 = vadd.f32 %v2217, %v2245
          %v2260 = vadd.f32 %v2218, %v2246
          %v2261 = vadd.f32 %v2219, %v2247
          %v2262 = vadd.f32 %v2220, %v2248
          %v2263 = vadd.f32 %v2221, %v2249
          %v2264 = vadd.f32 %v2222, %v2250
          %v2265 = vadd.f32 %v2223, %v2251
          %v2266 = vadd.f32 %v2224, %v2252
          %v2267 = vadd.f32 %v2225, %v2253
          %v2268 = vadd.f32 %v2226, %v2254
          %v2269 = vadd.f32 %v2227, %v2255
          %v2270 = vadd.f32 %v2228, %v2256
          %v2271 = vmul.f32 %v2257, %v2213
          %v2272 = vmul.f32 %v2258, %v2213
          %v2273 = vmul.f32 %v2259, %v2213
          %v2274 = vmul.f32 %v2260, %v2213
          %v2275 = vmul.f32 %v2261, %v2213
          %v2276 = vmul.f32 %v2262, %v2213
          %v2277 = vmul.f32 %v2263, %v2213
          %v2278 = vmul.f32 %v2264, %v2214
          %v2279 = vmul.f32 %v2265, %v2214
          %v2280 = vmul.f32 %v2266, %v2214
          %v2281 = vmul.f32 %v2267, %v2214
          %v2282 = vmul.f32 %v2268, %v2214
          %v2283 = vmul.f32 %v2269, %v2214
          %v2284 = vmul.f32 %v2270, %v2214
          %2285 = vst [vmem:[#allocation2] sm:$0xff] %v2271
          %2286 = vst [vmem:[#allocation2 + $0x8] sm:$0xff] %v2272
          %2287 = vst [vmem:[#allocation2 + $0x10] sm:$0xff] %v2273
          %2288 = vst [vmem:[#allocation2 + $0x18] sm:$0xff] %v2274
          %2289 = vst [vmem:[#allocation2 + $0x20] sm:$0xff] %v2275
          %2290 = vst [vmem:[#allocation2 + $0x28] sm:$0xff] %v2276
          %2291 = vst.msk [vmem:[#allocation2 + $0x30] sm:$0xff] %vm1537, %v2277
          %2292 = vst [vmem:[#allocation2 + $0x38] sm:$0xff] %v2278
          %2293 = vst [vmem:[#allocation2 + $0x40] sm:$0xff] %v2279
          %2294 = vst [vmem:[#allocation2 + $0x48] sm:$0xff] %v2280
          %2295 = vst [vmem:[#allocation2 + $0x50] sm:$0xff] %v2281
          %2296 = vst [vmem:[#allocation2 + $0x58] sm:$0xff] %v2282
          %2297 = vst [vmem:[#allocation2 + $0x60] sm:$0xff] %v2283
          %2298 = vst.msk [vmem:[#allocation2 + $0x68] sm:$0xff] %vm1537, %v2284
          %v2299 = vpack.c.bf16 %v2272, %v2271
          %v2300 = vpack.c.bf16 %v2274, %v2273
          %v2301 = vpack.c.bf16 %v2276, %v2275
          %v2302 = vpack.c.bf16 %v2277, %v2277
          %v2303 = vpack.c.bf16 %v2279, %v2278
          %v2304 = vpack.c.bf16 %v2281, %v2280
          %v2305 = vpack.c.bf16 %v2283, %v2282
          %v2306 = vpack.c.bf16 %v2284, %v2284
          %2307 = vst [vmem:[%s269] sm:$0xff] %v2299
          %2308 = vst [vmem:[%s269 + $0x8] sm:$0xff] %v2300
          %2309 = vst [vmem:[%s269 + $0x10] sm:$0xff] %v2301
          %vm2310 = vcmask 125952
          %2311 = vst.msk [vmem:[%s269 + $0x18] sm:$0xf] %vm2310, %v2302
          %2312 = vst [vmem:[%s269 + $0x1c] sm:$0xff] %v2303
          %2313 = vst [vmem:[%s269 + $0x24] sm:$0xff] %v2304
          %2314 = vst [vmem:[%s269 + $0x2c] sm:$0xff] %v2305
          %2315 = vst.msk [vmem:[%s269 + $0x34] sm:$0xf] %vm2310, %v2306
        $region52: #{_scoring_sequence_padded.1} parent=31 // pred_fallthru
          _
        %p2316 = scmp.eq.s32.totalorder %s29, 3
        // Predicated region
        $region53: #{_scoring_sequence_padded.1} parent=31 // pred_check
          %p2317 = pneg %p2316
        $region54: #{_scoring_sequence_padded.1} parent=31 // pred_check_branch
          %2319 = sbr.rel (%p2317) target = $region56
        $region55: #{_scoring_sequence_padded.1} parent=31 // pred_region
          %v2320 = vld [vmem:[#allocation2] sm:$0xff]
          %v2321 = vld [vmem:[#allocation2 + $0x8] sm:$0xff]
          %v2322 = vld [vmem:[#allocation2 + $0x10] sm:$0xff]
          %v2323 = vld [vmem:[#allocation2 + $0x18] sm:$0xff]
          %v2324 = vld [vmem:[#allocation2 + $0x20] sm:$0xff]
          %v2325 = vld [vmem:[#allocation2 + $0x28] sm:$0xff]
          %v2326 = vld [vmem:[#allocation2 + $0x30] sm:$0xff]
          %v2327 = vld [vmem:[#allocation2 + $0x38] sm:$0xff]
          %v2328 = vld [vmem:[#allocation2 + $0x40] sm:$0xff]
          %v2329 = vld [vmem:[#allocation2 + $0x48] sm:$0xff]
          %v2330 = vld [vmem:[#allocation2 + $0x50] sm:$0xff]
          %v2331 = vld [vmem:[#allocation2 + $0x58] sm:$0xff]
          %v2332 = vld [vmem:[#allocation2 + $0x60] sm:$0xff]
          %v2333 = vld [vmem:[#allocation2 + $0x68] sm:$0xff]
          %2334 = vst [vmem:[#allocation10] sm:$0xff] %v2320
          %2335 = vst [vmem:[#allocation10 + $0x8] sm:$0xff] %v2321
          %2336 = vst [vmem:[#allocation10 + $0x10] sm:$0xff] %v2322
          %2337 = vst [vmem:[#allocation10 + $0x18] sm:$0xff] %v2323
          %2338 = vst [vmem:[#allocation10 + $0x20] sm:$0xff] %v2324
          %2339 = vst [vmem:[#allocation10 + $0x28] sm:$0xff] %v2325
          %vm2340 = vcmask 130048
          %2341 = vst.msk [vmem:[#allocation10 + $0x30] sm:$0xff] %vm2340, %v2326
          %2342 = vst [vmem:[#allocation10 + $0x38] sm:$0xff] %v2327
          %2343 = vst [vmem:[#allocation10 + $0x40] sm:$0xff] %v2328
          %2344 = vst [vmem:[#allocation10 + $0x48] sm:$0xff] %v2329
          %2345 = vst [vmem:[#allocation10 + $0x50] sm:$0xff] %v2330
          %2346 = vst [vmem:[#allocation10 + $0x58] sm:$0xff] %v2331
          %2347 = vst [vmem:[#allocation10 + $0x60] sm:$0xff] %v2332
          %2348 = vst.msk [vmem:[#allocation10 + $0x68] sm:$0xff] %vm2340, %v2333
        $region56: #{_scoring_sequence_padded.1} parent=31 // pred_fallthru
          _
        %s2349 = sand.u32 %s116, 1
        %s2350 = scalar_lea.sflag [#allocation5], %s2349
        %s2351 = sand.u32 %s116, 1
        %s2352 = smul.addr %s2351, 56
        %s2353 = scalar_lea.vmem [#allocation9], %s2352
        // Predicated region
        $region57: #{_scoring_sequence_padded.1} parent=31 // pred_check
          %p2354 = pneg %p126
        $region58: #{_scoring_sequence_padded.1} parent=31 // pred_check_branch
          %2356 = sbr.rel (%p2354) target = $region60
        $region59: #{_scoring_sequence_padded.1} parent=31 // pred_region
          %s2357 = smul.u32 2, %s28
          %2359 = vsyncadd %s2350, 0
          %s2360 = smul.addr %s2357, 7
          %s2361 = smul.addr %s29, 14
          %s2362 = sadd.s32 %s2360, %s2361
          %s2363 = smul.addr %s2362, 4
          %s2364 = scalar_lea.hbm %s3, %s2363
          %s2365 = sshll.u32 %s2353, 4
          %s2366 = int_to_ptr.vmem [resolvable:$true] %s2365
          %s2367 = sshll.u32 %s2364, 4
          %s2368 = int_to_ptr.hbm [resolvable:$true] %s2367
          %2373 = dma.vmem_to_hbm [thread:$0]  %s2366, 896, %s2368, %s2350, 448, 448, 28
        $region60: #{_scoring_sequence_padded.1} parent=31 // pred_fallthru
          _
        // Predicated region
        $region61: #{_scoring_sequence_padded.1} parent=31 // pred_check
          %p2374 = pneg %p152
        $region62: #{_scoring_sequence_padded.1} parent=31 // pred_check_branch
          %2376 = sbr.rel (%p2374) target = $region64
        $region63: #{_scoring_sequence_padded.1} parent=31 // pred_region
          %s2377 = smul.u32 2, %s28
          %2379 = vsyncadd [#allocation11], 0
          %s2380 = smul.addr %s2377, 7
          %s2381 = smul.addr %s2380, 8
          %s2382 = scalar_lea.hbm %s4, %s2381
          %s2383 = sshll.u32 [#allocation10], 4
          %s2384 = int_to_ptr.vmem [resolvable:$true] %s2383
          %s2385 = sshll.u32 %s2382, 4
          %s2386 = int_to_ptr.hbm [resolvable:$true] %s2385
          %2391 = dma.vmem_to_hbm [thread:$0]  %s2384, 1792, %s2386, [#allocation11], 896, 896, 56
        $region64: #{_scoring_sequence_padded.1} parent=31 // pred_fallthru
          _
        // Predicated region
        $region65: #{_scoring_sequence_padded.1} parent=31 // pred_check
          %p2392 = pneg %p152
        $region66: #{_scoring_sequence_padded.1} parent=31 // pred_check_branch
          %2394 = sbr.rel (%p2392) target = $region68
        $region67: #{_scoring_sequence_padded.1} parent=31 // pred_region
          %2396 = dma.done [#allocation11], 1792
        $region68: #{_scoring_sequence_padded.1} parent=31 // pred_fallthru
          _
      $region32: #{_scoring_sequence_padded.1} parent=5 // pred_fallthru
        _
      %p2397 = scmp.le.s32.totalorder 2, %s19
      // Predicated region
      $region69: #{_scoring_sequence_padded.1} parent=5 // pred_check
        %p2398 = pneg %p2397
      $region70: #{_scoring_sequence_padded.1} parent=5 // pred_check_branch
        %2400 = sbr.rel (%p2398) target = $region72
      $region71: #{_scoring_sequence_padded.1} parent=5 // pred_region
        %s2401 = ssub.s32 %s19, 2
        // Predicated region
        $region73: #{_scoring_sequence_padded.1} parent=71 // pred_check
          %p2402 = pneg %p132
        $region74: #{_scoring_sequence_padded.1} parent=71 // pred_check_branch
          %2404 = sbr.rel (%p2402) target = $region76
        $region75: #{_scoring_sequence_padded.1} parent=71 // pred_region
          %s2405 = sand.u32 %s117, 1
          %s2406 = scalar_lea.sflag [#allocation5], %s2405
          %s2407 = sand.u32 %s117, 1
          %s2408 = smul.addr %s2407, 56
          %s2409 = scalar_lea.vmem [#allocation9], %s2408
          %2411 = dma.done %s2406, 896
        $region76: #{_scoring_sequence_padded.1} parent=71 // pred_fallthru
          _
      $region72: #{_scoring_sequence_padded.1} parent=5 // pred_fallthru
        _
    $region6: #{_scoring_sequence_padded.1} parent=1 // loop_footer
      %s23 = sadd.s32 1, %s19
    $region7: #{_scoring_sequence_padded.1} parent=1 // loop_footer_branch
      %18 = sbr.rel target = $region3
    $region8: #{_scoring_sequence_padded.1} parent=1 // loop_exit
      _
    %2412 = vsyncpa [#allocation4], 1
    %s2413 = scalar_lea.sflag [#allocation4], 1
    %2414 = vsyncpa %s2413, 1
    %2415 = vsyncpa [#allocation7], 1
    %2416 = vsyncpa [#allocation5], 1
    %s2417 = scalar_lea.sflag [#allocation5], 1
    %2418 = vsyncpa %s2417, 1
    %2419 = vsyncpa [#allocation11], 1

</llo_original>
